<compile_context>
chip_gen: v7x
topology: tpu7x:2x2x1
jax: 0.10.0
libtpu: 0.0.40
codegen_flags: <defaults>
</compile_context>

<pallas_src>
import functools
import math

import numpy as np
import jax
import jax.numpy as jnp
from jax.experimental import pallas as pl
from jax.experimental.pallas import tpu as pltpu


def _harmonic_kernel(x_ref, s_ref, phase_ref, o_ref):
    # x_ref:     (tm, P*dim)      f32 packed input rows
    # s_ref:     (P*dim, P*row_w) bf16 block-diagonal selection/frequency matrix
    # phase_ref: (1, P*row_w)     f32: 0 on sin lanes, pi/2 on cos lanes
    # o_ref:     (tm, P*row_w)
    x = x_ref[...]
    s = s_ref[...]
    # Exact f32 product as 3 default-precision bf16 MXU passes: every nonzero of
    # S_pack is a power of two (exact in bf16) and each output column has a
    # single nonzero, so splitting only x into bf16 terms reproduces the f32
    # result without precision=HIGHEST's 6 passes.
    x0 = x.astype(jnp.bfloat16)
    r1 = x - x0.astype(jnp.float32)
    x1 = r1.astype(jnp.bfloat16)
    x2 = (r1 - x1.astype(jnp.float32)).astype(jnp.bfloat16)
    emb = jnp.dot(x0, s, preferred_element_type=jnp.float32)
    emb = emb + jnp.dot(x1, s, preferred_element_type=jnp.float32)
    emb = emb + jnp.dot(x2, s, preferred_element_type=jnp.float32)
    # cos folded as sin(t + pi/2): one transcendental pass over the whole slab.
    o_ref[...] = jnp.sin(emb + phase_ref[...]).astype(o_ref.dtype)


@functools.lru_cache(maxsize=None)
def _pack_constants(dim: int, n_harm: int, omega0: float, logspace: bool):
    """Host-side (numpy) construction of the packed selection matrix and phase."""
    if logspace:
        freqs = 2.0 ** np.arange(n_harm, dtype=np.float32)
    else:
        freqs = np.linspace(1.0, 2.0 ** (n_harm - 1), n_harm, dtype=np.float32)
    freqs = (omega0 * freqs).astype(np.float32)
    dn = dim * n_harm
    row_w = 2 * dn                                      # output width per original row
    P = 128 // math.gcd(row_w, 128)                     # pack factor -> lane-dense output
    eye = np.eye(dim, dtype=np.float32)
    base = (eye[:, :, None] * freqs[None, None, :]).reshape(dim, dn)   # S[i, i*N+j] = f_j
    base2 = np.concatenate([base, base], axis=-1)                      # sin | cos lanes
    s_pack = np.kron(np.eye(P, dtype=np.float32), base2)               # (P*dim, P*row_w)
    phase_row = np.concatenate([np.zeros((dn,), np.float32),
                                np.full((dn,), 0.5 * np.pi, np.float32)])
    phase = np.tile(phase_row, P)[None, :].astype(np.float32)          # (1, P*row_w)
    return P, s_pack, phase


def make_frequencies(n_harmonic_functions: int = 6,
                     omega0: float = 1.0,
                     logspace: bool = True) -> jnp.ndarray:
    if logspace:
        freqs = 2.0 ** jnp.arange(n_harmonic_functions, dtype=jnp.float32)
    else:
        freqs = jnp.linspace(1.0, 2.0 ** (n_harmonic_functions - 1),
                             n_harmonic_functions, dtype=jnp.float32)
    return omega0 * freqs


@functools.partial(
    jax.jit,
    static_argnames=("n_harmonic_functions", "omega0", "logspace",
                     "block_rows", "out_dtype"))
def harmonic_embedding(x: jnp.ndarray,
                       *,
                       n_harmonic_functions: int = 6,
                       omega0: float = 1.0,
                       logspace: bool = True,
                       block_rows: int = 1024,
                       out_dtype=jnp.float32):
    """x: [..., dim] -> [..., 2 * dim * n_harmonic_functions].

    block_rows counts *packed* rows (one packed row = P original rows; P = 32
    for dim=3, N=6, so 1024 packed rows = 32768 original rows per grid step).
    out_dtype=jnp.bfloat16 halves the dominant output HBM writeback and is the
    recommended fast path on v5e.
    """
    orig_shape = x.shape
    dim = orig_shape[-1]
    n_harm = n_harmonic_functions

    P, s_np, phase_np = _pack_constants(dim, n_harm, float(omega0), bool(logspace))
    dn = dim * n_harm
    row_w = 2 * dn                  # 36 for dim=3, N=6
    in_w = P * dim                  # 96
    out_w = P * row_w               # 1152 = 9 * 128

    # Compile-time constants (no per-call on-device kron/tile).
    s_pack = jnp.asarray(s_np).astype(jnp.bfloat16)   # powers of two: exact in bf16
    phase = jnp.asarray(phase_np)                     # pi/2 must stay f32

    # --- pack rows (metadata-only reshape when M % P == 0) -------------------
    xf = x.reshape(-1, dim).astype(jnp.float32)
    m = xf.shape[0]
    pad = (-m) % P
    if pad:
        xf = jnp.pad(xf, ((0, pad), (0, 0)))          # only a (<P)-row pad
    mp = (m + pad) // P                               # packed rows
    xp = xf.reshape(mp, in_w)

    # --- per-device VMEM budget (includes in-kernel f32 intermediates) -------
    try:
        vmem_cap = int(pltpu.get_tpu_info().vmem_capacity_bytes)
    except Exception:
        vmem_cap = 64 << 20         # v7x per-TensorCore VMEM (smallest current gen)
    out_bytes = np.dtype(out_dtype).itemsize
    in_row = 128 * 4                                  # (tm, 96) f32, lane-padded to 128
    out_row = out_w * out_bytes
    acc_row = out_w * 4                               # f32 matmul / pre-cast slabs
    split_row = 128 * (3 * 2 + 2 * 4)                 # bf16 x0/x1/x2 + f32 residuals
    per_row = 2 * in_row + 2 * out_row + 3 * acc_row + split_row
    const_bytes = 2 * (in_w * out_w * 2) + 2 * (8 * out_w * 4)
    headroom = 4 << 20
    budget = int(0.8 * vmem_cap)
    tm_vmem = max(8, ((budget - const_bytes - headroom) // per_row) // 8 * 8)

    # --- tile / grid ----------------------------------------------------------
    if mp < 16:
        tm = mp                                       # full-dim block (always legal)
    else:
        tm_user = max(8, (block_rows // 8) * 8)       # (8,128)-legal tile
        tm_half = max(8, (pl.cdiv(mp, 2) // 8) * 8)   # >=2 grid steps (v7x: 2 TCs)
        tm = min(tm_user, tm_half, tm_vmem)
    grid_n = pl.cdiv(mp, tm)                          # ragged last block handled by Pallas

    required = tm * per_row + const_bytes
    vmem_limit = int(min(vmem_cap,
                         max(16 << 20, required + headroom + required // 4)))

    out = pl.pallas_call(
        _harmonic_kernel,
        out_shape=jax.ShapeDtypeStruct((mp, out_w), out_dtype),
        grid_spec=pltpu.PrefetchScalarGridSpec(
            num_scalar_prefetch=0,
            grid=(grid_n,),
            in_specs=[
                pl.BlockSpec((tm, in_w), lambda i: (i, 0)),
                pl.BlockSpec((in_w, out_w), lambda i: (0, 0)),   # resident constant
                pl.BlockSpec((1, out_w), lambda i: (0, 0)),      # resident constant
            ],
            out_specs=pl.BlockSpec((tm, out_w), lambda i: (i, 0)),
        ),
        compiler_params=pltpu.CompilerParams(
            dimension_semantics=("parallel",),
            vmem_limit_bytes=vmem_limit),
    )(xp, s_pack, phase)

    # Unpack (metadata-only reshape); slice only in the rare unaligned case.
    if pad:
        out = out.reshape(-1, row_w)[:m]
    return out.reshape(*orig_shape[:-1], row_w)


def _reference(x, frequencies):
    embed = (x[..., None] * frequencies).reshape(*x.shape[:-1], -1)
    return jnp.concatenate([jnp.sin(embed), jnp.cos(embed)], axis=-1)


if __name__ == "__main__":
    n_harm = 6   # xyz embedding of NerfExperts
    freqs = make_frequencies(n_harm, 1.0, logspace=True)

    # 1) Small, P-aligned case: 2*64 = 128 rows of 3-D points.
    x = jax.random.normal(jax.random.PRNGKey(0), (2, 64, 3), dtype=jnp.float32)
    out = jax.block_until_ready(harmonic_embedding(x, n_harmonic_functions=n_harm))
    ref = _reference(x, freqs)
    assert out.shape == (2, 64, 2 * 3 * n_harm), out.shape
    # cos folded as sin(t + pi/2) -> ulp-level differences vs jnp.cos.
    assert jnp.allclose(out, ref, atol=5e-4, rtol=5e-4), \
        f"mismatch vs reference, max abs err {jnp.max(jnp.abs(out - ref))}"

    # 2) Row count not a multiple of the packing factor (5*7 = 35 rows).
    x2 = jax.random.normal(jax.random.PRNGKey(1), (5, 7, 3), dtype=jnp.float32)
    out2 = jax.block_until_ready(harmonic_embedding(x2, n_harmonic_functions=n_harm))
    ref2 = _reference(x2, freqs)
    assert out2.shape == (5, 7, 36), out2.shape
    assert jnp.allclose(out2, ref2, atol=5e-4, rtol=5e-4), \
        f"ragged-pad mismatch, max abs err {jnp.max(jnp.abs(out2 - ref2))}"

    # 3) Multi-block grid with a ragged last block (2*2000 = 4000 rows -> 125
    #    packed rows -> tm=56, grid=3): exercises the cdiv grid and the >=2-step
    #    split needed for v7x megacore.
    x3 = jax.random.normal(jax.random.PRNGKey(2), (2, 2000, 3), dtype=jnp.float32)
    out3 = jax.block_until_ready(harmonic_embedding(x3, n_harmonic_functions=n_harm))
    ref3 = _reference(x3, freqs)
    assert out3.shape == (2, 2000, 36), out3.shape
    assert jnp.allclose(out3, ref3, atol=5e-4, rtol=5e-4), \
        f"multi-block mismatch, max abs err {jnp.max(jnp.abs(out3 - ref3))}"

    # 4) bf16 fast path (halves the output writeback; recommended on v5e).
    out_bf = jax.block_until_ready(
        harmonic_embedding(x, n_harmonic_functions=n_harm, out_dtype=jnp.bfloat16))
    assert out_bf.dtype == jnp.bfloat16
    assert jnp.allclose(out_bf.astype(jnp.float32), ref, atol=1e-2, rtol=1e-2), \
        f"bf16 mismatch, max abs err {jnp.max(jnp.abs(out_bf.astype(jnp.float32) - ref))}"

    print("KERNEL_OK")
</pallas_src>

<mosaic_0001>
module attributes {stable_mosaic.version = 11 : i64} {
  func.func @_harmonic_kernel(%arg0: i32, %arg1: memref<4x96xf32, #tpu.memory_space<vmem>>, %arg2: memref<96x1152xbf16, #tpu.memory_space<vmem>>, %arg3: memref<1x1152xf32, #tpu.memory_space<vmem>>, %arg4: memref<4x1152xf32, #tpu.memory_space<vmem>>) attributes {dimension_semantics = [#tpu.dimension_semantics<parallel>], iteration_bounds = array<i64: 1>, scalar_prefetch = 0 : i64, scratch_operands = 0 : i64, tpu.core_type = #tpu.core_type<tc>, window_params = [{transform_indices = @transform_0, window_bounds = array<i64: 4, 96>}, {pipeline_mode = #tpu.pipeline_mode<synchronous>, transform_indices = @transform_1, window_bounds = array<i64: 96, 1152>}, {pipeline_mode = #tpu.pipeline_mode<synchronous>, transform_indices = @transform_2, window_bounds = array<i64: 1, 1152>}, {transform_indices = @transform_3, window_bounds = array<i64: 4, 1152>}]} {
    %c0 = arith.constant 0 : index
    %c0_0 = arith.constant 0 : index
    %0 = vector.load %arg1[%c0, %c0_0] : memref<4x96xf32, #tpu.memory_space<vmem>>, vector<4x96xf32>
    %c0_1 = arith.constant 0 : index
    %c0_2 = arith.constant 0 : index
    %1 = vector.load %arg2[%c0_1, %c0_2] : memref<96x1152xbf16, #tpu.memory_space<vmem>>, vector<96x1152xbf16>
    %2 = arith.truncf %0 : vector<4x96xf32> to vector<4x96xbf16>
    %3 = arith.extf %2 : vector<4x96xbf16> to vector<4x96xf32>
    %4 = arith.subf %0, %3 : vector<4x96xf32>
    %5 = arith.truncf %4 : vector<4x96xf32> to vector<4x96xbf16>
    %6 = arith.extf %5 : vector<4x96xbf16> to vector<4x96xf32>
    %7 = arith.subf %4, %6 : vector<4x96xf32>
    %8 = arith.truncf %7 : vector<4x96xf32> to vector<4x96xbf16>
    %cst = arith.constant dense<0.000000e+00> : vector<4x1152xf32>
    %9 = tpu.matmul %2, %1, %cst {dimension_numbers = #tpu.dot_dimension_numbers<[1], [0], [0], [1], [0, 0, 1, 1], [], []>} : vector<4x96xbf16>, vector<96x1152xbf16>, vector<4x1152xf32> -> vector<4x1152xf32>
    %cst_3 = arith.constant dense<0.000000e+00> : vector<4x1152xf32>
    %10 = tpu.matmul %5, %1, %cst_3 {dimension_numbers = #tpu.dot_dimension_numbers<[1], [0], [0], [1], [0, 0, 1, 1], [], []>} : vector<4x96xbf16>, vector<96x1152xbf16>, vector<4x1152xf32> -> vector<4x1152xf32>
    %11 = arith.addf %9, %10 : vector<4x1152xf32>
    %cst_4 = arith.constant dense<0.000000e+00> : vector<4x1152xf32>
    %12 = tpu.matmul %8, %1, %cst_4 {dimension_numbers = #tpu.dot_dimension_numbers<[1], [0], [0], [1], [0, 0, 1, 1], [], []>} : vector<4x96xbf16>, vector<96x1152xbf16>, vector<4x1152xf32> -> vector<4x1152xf32>
    %13 = arith.addf %11, %12 : vector<4x1152xf32>
    %c0_5 = arith.constant 0 : index
    %c0_6 = arith.constant 0 : index
    %14 = vector.load %arg3[%c0_5, %c0_6] : memref<1x1152xf32, #tpu.memory_space<vmem>>, vector<1x1152xf32>
    %15 = vector.broadcast %14 : vector<1x1152xf32> to vector<4x1152xf32>
    %16 = arith.addf %13, %15 : vector<4x1152xf32>
    %17 = math.sin %16 : vector<4x1152xf32>
    %c0_7 = arith.constant 0 : index
    %c0_8 = arith.constant 0 : index
    %18 = vector.load %arg4[%c0_7, %c0_8] : memref<4x1152xf32, #tpu.memory_space<vmem>>, vector<4x1152xf32>
    tpu.vector_store %arg4[%c0_7, %c0_8], %17 {strides = array<i32>} : memref<4x1152xf32, #tpu.memory_space<vmem>>, vector<4x1152xf32>,
    return
  }
  func.func @transform_0(%arg0: i32) -> (i32, i32) {
    %c0_i32 = arith.constant 0 : i32
    %c0_i32_0 = arith.constant 0 : i32
    return %arg0, %c0_i32 : i32, i32
  }
  func.func @transform_1(%arg0: i32) -> (i32, i32) {
    %c0_i32 = arith.constant 0 : i32
    %c0_i32_0 = arith.constant 0 : i32
    %c0_i32_1 = arith.constant 0 : i32
    return %c0_i32, %c0_i32_0 : i32, i32
  }
  func.func @transform_2(%arg0: i32) -> (i32, i32) {
    %c0_i32 = arith.constant 0 : i32
    %c0_i32_0 = arith.constant 0 : i32
    %c0_i32_1 = arith.constant 0 : i32
    return %c0_i32, %c0_i32_0 : i32, i32
  }
  func.func @transform_3(%arg0: i32) -> (i32, i32) {
    %c0_i32 = arith.constant 0 : i32
    %c0_i32_0 = arith.constant 0 : i32
    return %arg0, %c0_i32 : i32, i32
  }
}

</mosaic_0001>

<llo_original>
// kernel: harmonic_embedding.1
$region0: #{harmonic_embedding.1}
  #allocation0 [shape = 'u32[]', space=smem, size = 0x4, offset = 0x4, fixed_abs, tag = 'smem constant byte address 0x4 - core index']
  #allocation1 [shape = 'u32[144,128]{1,0:T(1,128)}', space=vmem, size = 0x12000, scoped, tag = 'internal scratch']
  %s0 = inlined_call_operand.vmem [shape: f32[4,96], index: 0, kind: input, shape index: {}]
  %s1 = inlined_call_operand.vmem [shape: bf16[96,1152], index: 1, kind: input, shape index: {}]
  %s2 = inlined_call_operand.vmem [shape: f32[1,1152], index: 2, kind: input, shape index: {}]
  %s3 = inlined_call_operand.vmem [shape: f32[4,1152], index: 3, kind: output, shape index: {}]
  %s4 = sld [smem:[#allocation0]]
  $region22: #{harmonic_embedding.1} parent=0
    _
  %s6 = ssub.s32 1, %s4
  %s7 = scalar_select 0, %s6, %s4
  // Predicated region
  $region2: #{harmonic_embedding.1} parent=0 // pred_check
    _
  $region3: #{harmonic_embedding.1} parent=0 // pred_check_branch
    %9 = sbr.rel (0) target = $region5
  $region4: #{harmonic_embedding.1} parent=0 // pred_region
    _
  $region5: #{harmonic_embedding.1} parent=0 // pred_fallthru
    _
  // Predicated region
  $region6: #{harmonic_embedding.1} parent=0 // pred_check
    _
  $region7: #{harmonic_embedding.1} parent=0 // pred_check_branch
    %11 = sbr.rel (0) target = $region9
  $region8: #{harmonic_embedding.1} parent=0 // pred_region
    _
  $region9: #{harmonic_embedding.1} parent=0 // pred_fallthru
    _
  // Predicated region
  $region10: #{harmonic_embedding.1} parent=0 // pred_check
    _
  $region11: #{harmonic_embedding.1} parent=0 // pred_check_branch
    %13 = sbr.rel (0) target = $region13
  $region12: #{harmonic_embedding.1} parent=0 // pred_region
    _
  $region13: #{harmonic_embedding.1} parent=0 // pred_fallthru
    _
  %v15 = vld [vmem:[%s0] sm:$0xf]
  %v16 = vld [vmem:[%s1] sm:$0xff]
  %v17 = vld [vmem:[%s1 + $0x8] sm:$0xff]
  %v18 = vld [vmem:[%s1 + $0x10] sm:$0xff]
  %v19 = vld [vmem:[%s1 + $0x18] sm:$0xff]
  %v20 = vld [vmem:[%s1 + $0x20] sm:$0xf]
  %v21 = vld [vmem:[%s1 + $0x24] sm:$0xff]
  %v22 = vld [vmem:[%s1 + $0x2c] sm:$0xff]
  %v23 = vld [vmem:[%s1 + $0x34] sm:$0xff]
  %v24 = vld [vmem:[%s1 + $0x3c] sm:$0xff]
  %v25 = vld [vmem:[%s1 + $0x44] sm:$0xf]
  %v26 = vld [vmem:[%s1 + $0x48] sm:$0xff]
  %v27 = vld [vmem:[%s1 + $0x50] sm:$0xff]
  %v28 = vld [vmem:[%s1 + $0x58] sm:$0xff]
  %v29 = vld [vmem:[%s1 + $0x60] sm:$0xff]
  %v30 = vld [vmem:[%s1 + $0x68] sm:$0xf]
  %v31 = vld [vmem:[%s1 + $0x6c] sm:$0xff]
  %v32 = vld [vmem:[%s1 + $0x74] sm:$0xff]
  %v33 = vld [vmem:[%s1 + $0x7c] sm:$0xff]
  %v34 = vld [vmem:[%s1 + $0x84] sm:$0xff]
  %v35 = vld [vmem:[%s1 + $0x8c] sm:$0xf]
  %v36 = vld [vmem:[%s1 + $0x90] sm:$0xff]
  %v37 = vld [vmem:[%s1 + $0x98] sm:$0xff]
  %v38 = vld [vmem:[%s1 + $0xa0] sm:$0xff]
  %v39 = vld [vmem:[%s1 + $0xa8] sm:$0xff]
  %v40 = vld [vmem:[%s1 + $0xb0] sm:$0xf]
  %v41 = vld [vmem:[%s1 + $0xb4] sm:$0xff]
  %v42 = vld [vmem:[%s1 + $0xbc] sm:$0xff]
  %v43 = vld [vmem:[%s1 + $0xc4] sm:$0xff]
  %v44 = vld [vmem:[%s1 + $0xcc] sm:$0xff]
  %v45 = vld [vmem:[%s1 + $0xd4] sm:$0xf]
  %v46 = vld [vmem:[%s1 + $0xd8] sm:$0xff]
  %v47 = vld [vmem:[%s1 + $0xe0] sm:$0xff]
  %v48 = vld [vmem:[%s1 + $0xe8] sm:$0xff]
  %v49 = vld [vmem:[%s1 + $0xf0] sm:$0xff]
  %v50 = vld [vmem:[%s1 + $0xf8] sm:$0xf]
  %v51 = vld [vmem:[%s1 + $0xfc] sm:$0xff]
  %v52 = vld [vmem:[%s1 + $0x104] sm:$0xff]
  %v53 = vld [vmem:[%s1 + $0x10c] sm:$0xff]
  %v54 = vld [vmem:[%s1 + $0x114] sm:$0xff]
  %v55 = vld [vmem:[%s1 + $0x11c] sm:$0xf]
  %v56 = vld [vmem:[%s1 + $0x120] sm:$0xff]
  %v57 = vld [vmem:[%s1 + $0x128] sm:$0xff]
  %v58 = vld [vmem:[%s1 + $0x130] sm:$0xff]
  %v59 = vld [vmem:[%s1 + $0x138] sm:$0xff]
  %v60 = vld [vmem:[%s1 + $0x140] sm:$0xf]
  %v61 = vld [vmem:[%s1 + $0x144] sm:$0xff]
  %v62 = vld [vmem:[%s1 + $0x14c] sm:$0xff]
  %v63 = vld [vmem:[%s1 + $0x154] sm:$0xff]
  %v64 = vld [vmem:[%s1 + $0x15c] sm:$0xff]
  %v65 = vld [vmem:[%s1 + $0x164] sm:$0xf]
  %v66 = vld [vmem:[%s1 + $0x168] sm:$0xff]
  %v67 = vld [vmem:[%s1 + $0x170] sm:$0xff]
  %v68 = vld [vmem:[%s1 + $0x178] sm:$0xff]
  %v69 = vld [vmem:[%s1 + $0x180] sm:$0xff]
  %v70 = vld [vmem:[%s1 + $0x188] sm:$0xf]
  %v71 = vld [vmem:[%s1 + $0x18c] sm:$0xff]
  %v72 = vld [vmem:[%s1 + $0x194] sm:$0xff]
  %v73 = vld [vmem:[%s1 + $0x19c] sm:$0xff]
  %v74 = vld [vmem:[%s1 + $0x1a4] sm:$0xff]
  %v75 = vld [vmem:[%s1 + $0x1ac] sm:$0xf]
  %v76 = vpack.c.bf16 %v15, %v15
  %v77 = vunpack.c.l.bf16 %v76
  %v78 = vsub.f32 %v15, %v77
  %v79 = vpack.c.bf16 %v78, %v78
  %v80 = vunpack.c.l.bf16 %v79
  %v81 = vsub.f32 %v78, %v80
  %v82 = vpack.c.bf16 %v81, %v81
  %v143 = vunpack.c.l.b16 %v16
  %v144 = vunpack.c.h.b16 %v16
  %v145 = vunpack.c.l.b16 %v17
  %v146 = vunpack.c.h.b16 %v17
  %v147 = vunpack.c.l.b16 %v18
  %v148 = vunpack.c.h.b16 %v18
  %v149 = vunpack.c.l.b16 %v19
  %v150 = vunpack.c.h.b16 %v19
  %v151 = vunpack.c.l.b16 %v20
  %v152 = vunpack.c.l.b16 %v21
  %v153 = vunpack.c.h.b16 %v21
  %v154 = vunpack.c.l.b16 %v22
  %v155 = vunpack.c.h.b16 %v22
  %v156 = vunpack.c.l.b16 %v23
  %v157 = vunpack.c.h.b16 %v23
  %v158 = vunpack.c.l.b16 %v24
  %v159 = vunpack.c.h.b16 %v24
  %v160 = vunpack.c.l.b16 %v25
  %v161 = vunpack.c.l.b16 %v26
  %v162 = vunpack.c.h.b16 %v26
  %v163 = vunpack.c.l.b16 %v27
  %v164 = vunpack.c.h.b16 %v27
  %v165 = vunpack.c.l.b16 %v28
  %v166 = vunpack.c.h.b16 %v28
  %v167 = vunpack.c.l.b16 %v29
  %v168 = vunpack.c.h.b16 %v29
  %v169 = vunpack.c.l.b16 %v30
  %v170 = vunpack.c.l.b16 %v31
  %v171 = vunpack.c.h.b16 %v31
  %v172 = vunpack.c.l.b16 %v32
  %v173 = vunpack.c.h.b16 %v32
  %v174 = vunpack.c.l.b16 %v33
  %v175 = vunpack.c.h.b16 %v33
  %v176 = vunpack.c.l.b16 %v34
  %v177 = vunpack.c.h.b16 %v34
  %v178 = vunpack.c.l.b16 %v35
  %v179 = vunpack.c.l.b16 %v36
  %v180 = vunpack.c.h.b16 %v36
  %v181 = vunpack.c.l.b16 %v37
  %v182 = vunpack.c.h.b16 %v37
  %v183 = vunpack.c.l.b16 %v38
  %v184 = vunpack.c.h.b16 %v38
  %v185 = vunpack.c.l.b16 %v39
  %v186 = vunpack.c.h.b16 %v39
  %v187 = vunpack.c.l.b16 %v40
  %v188 = vunpack.c.l.b16 %v41
  %v189 = vunpack.c.h.b16 %v41
  %v190 = vunpack.c.l.b16 %v42
  %v191 = vunpack.c.h.b16 %v42
  %v192 = vunpack.c.l.b16 %v43
  %v193 = vunpack.c.h.b16 %v43
  %v194 = vunpack.c.l.b16 %v44
  %v195 = vunpack.c.h.b16 %v44
  %v196 = vunpack.c.l.b16 %v45
  %v197 = vunpack.c.l.b16 %v46
  %v198 = vunpack.c.h.b16 %v46
  %v199 = vunpack.c.l.b16 %v47
  %v200 = vunpack.c.h.b16 %v47
  %v201 = vunpack.c.l.b16 %v48
  %v202 = vunpack.c.h.b16 %v48
  %v203 = vunpack.c.l.b16 %v49
  %v204 = vunpack.c.h.b16 %v49
  %v205 = vunpack.c.l.b16 %v50
  %v206 = vunpack.c.l.b16 %v51
  %v207 = vunpack.c.h.b16 %v51
  %v208 = vunpack.c.l.b16 %v52
  %v209 = vunpack.c.h.b16 %v52
  %v210 = vunpack.c.l.b16 %v53
  %v211 = vunpack.c.h.b16 %v53
  %v212 = vunpack.c.l.b16 %v54
  %v213 = vunpack.c.h.b16 %v54
  %v214 = vunpack.c.l.b16 %v55
  %v215 = vunpack.c.l.b16 %v56
  %v216 = vunpack.c.h.b16 %v56
  %v217 = vunpack.c.l.b16 %v57
  %v218 = vunpack.c.h.b16 %v57
  %v219 = vunpack.c.l.b16 %v58
  %v220 = vunpack.c.h.b16 %v58
  %v221 = vunpack.c.l.b16 %v59
  %v222 = vunpack.c.h.b16 %v59
  %v223 = vunpack.c.l.b16 %v60
  %v224 = vunpack.c.l.b16 %v61
  %v225 = vunpack.c.h.b16 %v61
  %v226 = vunpack.c.l.b16 %v62
  %v227 = vunpack.c.h.b16 %v62
  %v228 = vunpack.c.l.b16 %v63
  %v229 = vunpack.c.h.b16 %v63
  %v230 = vunpack.c.l.b16 %v64
  %v231 = vunpack.c.h.b16 %v64
  %v232 = vunpack.c.l.b16 %v65
  %v233 = vunpack.c.l.b16 %v66
  %v234 = vunpack.c.h.b16 %v66
  %v235 = vunpack.c.l.b16 %v67
  %v236 = vunpack.c.h.b16 %v67
  %v237 = vunpack.c.l.b16 %v68
  %v238 = vunpack.c.h.b16 %v68
  %v239 = vunpack.c.l.b16 %v69
  %v240 = vunpack.c.h.b16 %v69
  %v241 = vunpack.c.l.b16 %v70
  %v242 = vunpack.c.l.b16 %v71
  %v243 = vunpack.c.h.b16 %v71
  %v244 = vunpack.c.l.b16 %v72
  %v245 = vunpack.c.h.b16 %v72
  %v246 = vunpack.c.l.b16 %v73
  %v247 = vunpack.c.h.b16 %v73
  %v248 = vunpack.c.l.b16 %v74
  %v249 = vunpack.c.h.b16 %v74
  %v250 = vunpack.c.l.b16 %v75
  %v251 = vpack.c.b16 %v152, %v143
  %v252 = vpack.c.b16 %v153, %v144
  %v253 = vpack.c.b16 %v154, %v145
  %v254 = vpack.c.b16 %v155, %v146
  %v255 = vpack.c.b16 %v156, %v147
  %v256 = vpack.c.b16 %v157, %v148
  %v257 = vpack.c.b16 %v158, %v149
  %v258 = vpack.c.b16 %v159, %v150
  %v259 = vpack.c.b16 %v160, %v151
  %v260 = vpack.c.b16 %v170, %v161
  %v261 = vpack.c.b16 %v171, %v162
  %v262 = vpack.c.b16 %v172, %v163
  %v263 = vpack.c.b16 %v173, %v164
  %v264 = vpack.c.b16 %v174, %v165
  %v265 = vpack.c.b16 %v175, %v166
  %v266 = vpack.c.b16 %v176, %v167
  %v267 = vpack.c.b16 %v177, %v168
  %v268 = vpack.c.b16 %v178, %v169
  %v269 = vpack.c.b16 %v188, %v179
  %v270 = vpack.c.b16 %v189, %v180
  %v271 = vpack.c.b16 %v190, %v181
  %v272 = vpack.c.b16 %v191, %v182
  %v273 = vpack.c.b16 %v192, %v183
  %v274 = vpack.c.b16 %v193, %v184
  %v275 = vpack.c.b16 %v194, %v185
  %v276 = vpack.c.b16 %v195, %v186
  %v277 = vpack.c.b16 %v196, %v187
  %v278 = vpack.c.b16 %v206, %v197
  %v279 = vpack.c.b16 %v207, %v198
  %v280 = vpack.c.b16 %v208, %v199
  %v281 = vpack.c.b16 %v209, %v200
  %v282 = vpack.c.b16 %v210, %v201
  %v283 = vpack.c.b16 %v211, %v202
  %v284 = vpack.c.b16 %v212, %v203
  %v285 = vpack.c.b16 %v213, %v204
  %v286 = vpack.c.b16 %v214, %v205
  %v287 = vpack.c.b16 %v224, %v215
  %v288 = vpack.c.b16 %v225, %v216
  %v289 = vpack.c.b16 %v226, %v217
  %v290 = vpack.c.b16 %v227, %v218
  %v291 = vpack.c.b16 %v228, %v219
  %v292 = vpack.c.b16 %v229, %v220
  %v293 = vpack.c.b16 %v230, %v221
  %v294 = vpack.c.b16 %v231, %v222
  %v295 = vpack.c.b16 %v232, %v223
  %v296 = vpack.c.b16 %v242, %v233
  %v297 = vpack.c.b16 %v243, %v234
  %v298 = vpack.c.b16 %v244, %v235
  %v299 = vpack.c.b16 %v245, %v236
  %v300 = vpack.c.b16 %v246, %v237
  %v301 = vpack.c.b16 %v247, %v238
  %v302 = vpack.c.b16 %v248, %v239
  %v303 = vpack.c.b16 %v249, %v240
  %v304 = vpack.c.b16 %v250, %v241
  %vm359 = vcmask 785408
  %v361 = vsel %vm359, %v79, 0
  %363 = vmatprep.subr.bf16.mxu0 %v252
  %364 = vmatpush1.bf16.msra.mxu0 %v251
  %365 = vmatprep.subr.bf16.mxu0 %v261
  %366 = vmatpush1.bf16.msra.mxu0 %v260
  %367 = vmatprep.subr.bf16.mxu0 %v270
  %368 = vmatpush1.bf16.msra.mxu0 %v269
  %369 = vmatprep.subr.bf16.mxu0 %v279
  %370 = vmatpush1.bf16.msra.mxu0 %v278
  %371 = vmatprep.subr.bf16.mxu0 %v288
  %372 = vmatpush1.bf16.msra.mxu0 %v287
  %373 = vmatprep.subr.bf16.mxu0 %v297
  %374 = vmatpush1.bf16.msra.mxu0 %v296
  %375 = vmatprep.subr.bf16.mxu0 0
  %376 = vmatpush1.bf16.msra.mxu0 0
  %377 = vmatprep.subr.bf16.mxu0 0
  %378 = vmatpush1.bf16.msra.mxu0 0
  %379 = vmatprep.subr.bf16.mxu0 0
  %380 = vmatpush1.bf16.msra.mxu0 0
  %381 = vmatprep.subr.bf16.mxu0 0
  %382 = vmatpush1.bf16.msra.mxu0 0
  %383 = vmatprep.subr.bf16.mxu0 0
  %384 = vmatpush1.bf16.msra.mxu0 0
  %385 = vmatprep.subr.bf16.mxu0 0
  %386 = vmatpush1.bf16.msra.mxu0 0
  %387 = vmatprep.subr.bf16.mxu0 0
  %388 = vmatpush1.bf16.msra.mxu0 0
  %389 = vmatprep.subr.bf16.mxu0 0
  %390 = vmatpush1.bf16.msra.mxu0 0
  %391 = vmatprep.subr.bf16.mxu0 0
  %392 = vmatpush1.bf16.msra.mxu0 0
  %393 = vmatprep.subr.bf16.mxu0 0
  %394 = vmatpush1.bf16.msra.mxu0 0
  %395 = vmatprep.mubr.bf16.mxu0 0
  %396 = vmatmul.mubr.bf16.gmra.mrb[0].mxu0 %v361
  %v397 = vpop.f32.mrb[0].mxu0
  %v398 = vadd.f32 0.0, %v397
  %v399 = vpop.f32.mrb[0].mxu0
  %v400 = vadd.f32 0.0, %v399
  %v401 = vpop.f32.mrb[0].mxu0
  %v402 = vpop.f32.mrb[0].mxu0
  %403 = vdwg.mxu0
  %404 = vmatprep.subr.bf16.mxu0 %v254
  %405 = vmatpush1.bf16.msra.mxu0 %v253
  %406 = vmatprep.subr.bf16.mxu0 %v263
  %407 = vmatpush1.bf16.msra.mxu0 %v262
  %408 = vmatprep.subr.bf16.mxu0 %v272
  %409 = vmatpush1.bf16.msra.mxu0 %v271
  %410 = vmatprep.subr.bf16.mxu0 %v281
  %411 = vmatpush1.bf16.msra.mxu0 %v280
  %412 = vmatprep.subr.bf16.mxu0 %v290
  %413 = vmatpush1.bf16.msra.mxu0 %v289
  %414 = vmatprep.subr.bf16.mxu0 %v299
  %415 = vmatpush1.bf16.msra.mxu0 %v298
  %416 = vmatprep.subr.bf16.mxu0 0
  %417 = vmatpush1.bf16.msra.mxu0 0
  %418 = vmatprep.subr.bf16.mxu0 0
  %419 = vmatpush1.bf16.msra.mxu0 0
  %420 = vmatprep.subr.bf16.mxu0 0
  %421 = vmatpush1.bf16.msra.mxu0 0
  %422 = vmatprep.subr.bf16.mxu0 0
  %423 = vmatpush1.bf16.msra.mxu0 0
  %424 = vmatprep.subr.bf16.mxu0 0
  %425 = vmatpush1.bf16.msra.mxu0 0
  %426 = vmatprep.subr.bf16.mxu0 0
  %427 = vmatpush1.bf16.msra.mxu0 0
  %428 = vmatprep.subr.bf16.mxu0 0
  %429 = vmatpush1.bf16.msra.mxu0 0
  %430 = vmatprep.subr.bf16.mxu0 0
  %431 = vmatpush1.bf16.msra.mxu0 0
  %432 = vmatprep.subr.bf16.mxu0 0
  %433 = vmatpush1.bf16.msra.mxu0 0
  %434 = vmatprep.subr.bf16.mxu0 0
  %435 = vmatpush1.bf16.msra.mxu0 0
  %436 = vmatprep.mubr.bf16.mxu0 0
  %437 = vmatmul.mubr.bf16.gmra.mrb[0].mxu0 %v361
  %v438 = vpop.f32.mrb[0].mxu0
  %v439 = vadd.f32 0.0, %v438
  %v440 = vpop.f32.mrb[0].mxu0
  %v441 = vadd.f32 0.0, %v440
  %v442 = vpop.f32.mrb[0].mxu0
  %v443 = vpop.f32.mrb[0].mxu0
  %444 = vdwg.mxu0
  %445 = vmatprep.subr.bf16.mxu0 %v256
  %446 = vmatpush1.bf16.msra.mxu0 %v255
  %447 = vmatprep.subr.bf16.mxu0 %v265
  %448 = vmatpush1.bf16.msra.mxu0 %v264
  %449 = vmatprep.subr.bf16.mxu0 %v274
  %450 = vmatpush1.bf16.msra.mxu0 %v273
  %451 = vmatprep.subr.bf16.mxu0 %v283
  %452 = vmatpush1.bf16.msra.mxu0 %v282
  %453 = vmatprep.subr.bf16.mxu0 %v292
  %454 = vmatpush1.bf16.msra.mxu0 %v291
  %455 = vmatprep.subr.bf16.mxu0 %v301
  %456 = vmatpush1.bf16.msra.mxu0 %v300
  %457 = vmatprep.subr.bf16.mxu0 0
  %458 = vmatpush1.bf16.msra.mxu0 0
  %459 = vmatprep.subr.bf16.mxu0 0
  %460 = vmatpush1.bf16.msra.mxu0 0
  %461 = vmatprep.subr.bf16.mxu0 0
  %462 = vmatpush1.bf16.msra.mxu0 0
  %463 = vmatprep.subr.bf16.mxu0 0
  %464 = vmatpush1.bf16.msra.mxu0 0
  %465 = vmatprep.subr.bf16.mxu0 0
  %466 = vmatpush1.bf16.msra.mxu0 0
  %467 = vmatprep.subr.bf16.mxu0 0
  %468 = vmatpush1.bf16.msra.mxu0 0
  %469 = vmatprep.subr.bf16.mxu0 0
  %470 = vmatpush1.bf16.msra.mxu0 0
  %471 = vmatprep.subr.bf16.mxu0 0
  %472 = vmatpush1.bf16.msra.mxu0 0
  %473 = vmatprep.subr.bf16.mxu0 0
  %474 = vmatpush1.bf16.msra.mxu0 0
  %475 = vmatprep.subr.bf16.mxu0 0
  %476 = vmatpush1.bf16.msra.mxu0 0
  %477 = vmatprep.mubr.bf16.mxu0 0
  %478 = vmatmul.mubr.bf16.gmra.mrb[0].mxu0 %v361
  %v479 = vpop.f32.mrb[0].mxu0
  %v480 = vadd.f32 0.0, %v479
  %v481 = vpop.f32.mrb[0].mxu0
  %v482 = vadd.f32 0.0, %v481
  %v483 = vpop.f32.mrb[0].mxu0
  %v484 = vpop.f32.mrb[0].mxu0
  %485 = vdwg.mxu0
  %486 = vmatprep.subr.bf16.mxu0 %v258
  %487 = vmatpush1.bf16.msra.mxu0 %v257
  %488 = vmatprep.subr.bf16.mxu0 %v267
  %489 = vmatpush1.bf16.msra.mxu0 %v266
  %490 = vmatprep.subr.bf16.mxu0 %v276
  %491 = vmatpush1.bf16.msra.mxu0 %v275
  %492 = vmatprep.subr.bf16.mxu0 %v285
  %493 = vmatpush1.bf16.msra.mxu0 %v284
  %494 = vmatprep.subr.bf16.mxu0 %v294
  %495 = vmatpush1.bf16.msra.mxu0 %v293
  %496 = vmatprep.subr.bf16.mxu0 %v303
  %497 = vmatpush1.bf16.msra.mxu0 %v302
  %498 = vmatprep.subr.bf16.mxu0 0
  %499 = vmatpush1.bf16.msra.mxu0 0
  %500 = vmatprep.subr.bf16.mxu0 0
  %501 = vmatpush1.bf16.msra.mxu0 0
  %502 = vmatprep.subr.bf16.mxu0 0
  %503 = vmatpush1.bf16.msra.mxu0 0
  %504 = vmatprep.subr.bf16.mxu0 0
  %505 = vmatpush1.bf16.msra.mxu0 0
  %506 = vmatprep.subr.bf16.mxu0 0
  %507 = vmatpush1.bf16.msra.mxu0 0
  %508 = vmatprep.subr.bf16.mxu0 0
  %509 = vmatpush1.bf16.msra.mxu0 0
  %510 = vmatprep.subr.bf16.mxu0 0
  %511 = vmatpush1.bf16.msra.mxu0 0
  %512 = vmatprep.subr.bf16.mxu0 0
  %513 = vmatpush1.bf16.msra.mxu0 0
  %514 = vmatprep.subr.bf16.mxu0 0
  %515 = vmatpush1.bf16.msra.mxu0 0
  %516 = vmatprep.subr.bf16.mxu0 0
  %517 = vmatpush1.bf16.msra.mxu0 0
  %518 = vmatprep.mubr.bf16.mxu0 0
  %519 = vmatmul.mubr.bf16.gmra.mrb[0].mxu0 %v361
  %v520 = vpop.f32.mrb[0].mxu0
  %v521 = vadd.f32 0.0, %v520
  %v522 = vpop.f32.mrb[0].mxu0
  %v523 = vadd.f32 0.0, %v522
  %v524 = vpop.f32.mrb[0].mxu0
  %v525 = vpop.f32.mrb[0].mxu0
  %526 = vdwg.mxu0
  %527 = vmatprep.subr.bf16.mxu0 0
  %528 = vmatpush1.bf16.msra.mxu0 %v259
  %529 = vmatprep.subr.bf16.mxu0 0
  %530 = vmatpush1.bf16.msra.mxu0 %v268
  %531 = vmatprep.subr.bf16.mxu0 0
  %532 = vmatpush1.bf16.msra.mxu0 %v277
  %533 = vmatprep.subr.bf16.mxu0 0
  %534 = vmatpush1.bf16.msra.mxu0 %v286
  %535 = vmatprep.subr.bf16.mxu0 0
  %536 = vmatpush1.bf16.msra.mxu0 %v295
  %537 = vmatprep.subr.bf16.mxu0 0
  %538 = vmatpush1.bf16.msra.mxu0 %v304
  %539 = vmatprep.subr.bf16.mxu0 0
  %540 = vmatpush1.bf16.msra.mxu0 0
  %541 = vmatprep.subr.bf16.mxu0 0
  %542 = vmatpush1.bf16.msra.mxu0 0
  %543 = vmatprep.subr.bf16.mxu0 0
  %544 = vmatpush1.bf16.msra.mxu0 0
  %545 = vmatprep.subr.bf16.mxu0 0
  %546 = vmatpush1.bf16.msra.mxu0 0
  %547 = vmatprep.subr.bf16.mxu0 0
  %548 = vmatpush1.bf16.msra.mxu0 0
  %549 = vmatprep.subr.bf16.mxu0 0
  %550 = vmatpush1.bf16.msra.mxu0 0
  %551 = vmatprep.subr.bf16.mxu0 0
  %552 = vmatpush1.bf16.msra.mxu0 0
  %553 = vmatprep.subr.bf16.mxu0 0
  %554 = vmatpush1.bf16.msra.mxu0 0
  %555 = vmatprep.subr.bf16.mxu0 0
  %556 = vmatpush1.bf16.msra.mxu0 0
  %557 = vmatprep.subr.bf16.mxu0 0
  %558 = vmatpush1.bf16.msra.mxu0 0
  %559 = vmatprep.mubr.bf16.mxu0 0
  %560 = vmatmul.mubr.bf16.gmra.mrb[0].mxu0 %v361
  %v561 = vpop.f32.mrb[0].mxu0
  %v562 = vadd.f32 0.0, %v561
  %v563 = vpop.f32.mrb[0].mxu0
  %v564 = vpop.f32.mrb[0].mxu0
  %v565 = vpop.f32.mrb[0].mxu0
  %566 = vdwg.mxu0
  %v568 = vsel %vm359, %v76, 0
  %570 = vmatprep.subr.bf16.mxu0 %v252
  %571 = vmatpush1.bf16.msra.mxu0 %v251
  %572 = vmatprep.subr.bf16.mxu0 %v261
  %573 = vmatpush1.bf16.msra.mxu0 %v260
  %574 = vmatprep.subr.bf16.mxu0 %v270
  %575 = vmatpush1.bf16.msra.mxu0 %v269
  %576 = vmatprep.subr.bf16.mxu0 %v279
  %577 = vmatpush1.bf16.msra.mxu0 %v278
  %578 = vmatprep.subr.bf16.mxu0 %v288
  %579 = vmatpush1.bf16.msra.mxu0 %v287
  %580 = vmatprep.subr.bf16.mxu0 %v297
  %581 = vmatpush1.bf16.msra.mxu0 %v296
  %582 = vmatprep.subr.bf16.mxu0 0
  %583 = vmatpush1.bf16.msra.mxu0 0
  %584 = vmatprep.subr.bf16.mxu0 0
  %585 = vmatpush1.bf16.msra.mxu0 0
  %586 = vmatprep.subr.bf16.mxu0 0
  %587 = vmatpush1.bf16.msra.mxu0 0
  %588 = vmatprep.subr.bf16.mxu0 0
  %589 = vmatpush1.bf16.msra.mxu0 0
  %590 = vmatprep.subr.bf16.mxu0 0
  %591 = vmatpush1.bf16.msra.mxu0 0
  %592 = vmatprep.subr.bf16.mxu0 0
  %593 = vmatpush1.bf16.msra.mxu0 0
  %594 = vmatprep.subr.bf16.mxu0 0
  %595 = vmatpush1.bf16.msra.mxu0 0
  %596 = vmatprep.subr.bf16.mxu0 0
  %597 = vmatpush1.bf16.msra.mxu0 0
  %598 = vmatprep.subr.bf16.mxu0 0
  %599 = vmatpush1.bf16.msra.mxu0 0
  %600 = vmatprep.subr.bf16.mxu0 0
  %601 = vmatpush1.bf16.msra.mxu0 0
  %602 = vmatprep.mubr.bf16.mxu0 0
  %603 = vmatmul.mubr.bf16.gmra.mrb[0].mxu0 %v568
  %v604 = vpop.f32.mrb[0].mxu0
  %v605 = vadd.f32 %v398, %v604
  %v606 = vpop.f32.mrb[0].mxu0
  %v607 = vadd.f32 %v400, %v606
  %v608 = vpop.f32.mrb[0].mxu0
  %v609 = vpop.f32.mrb[0].mxu0
  %610 = vdwg.mxu0
  %611 = vmatprep.subr.bf16.mxu0 %v254
  %612 = vmatpush1.bf16.msra.mxu0 %v253
  %613 = vmatprep.subr.bf16.mxu0 %v263
  %614 = vmatpush1.bf16.msra.mxu0 %v262
  %615 = vmatprep.subr.bf16.mxu0 %v272
  %616 = vmatpush1.bf16.msra.mxu0 %v271
  %617 = vmatprep.subr.bf16.mxu0 %v281
  %618 = vmatpush1.bf16.msra.mxu0 %v280
  %619 = vmatprep.subr.bf16.mxu0 %v290
  %620 = vmatpush1.bf16.msra.mxu0 %v289
  %621 = vmatprep.subr.bf16.mxu0 %v299
  %622 = vmatpush1.bf16.msra.mxu0 %v298
  %623 = vmatprep.subr.bf16.mxu0 0
  %624 = vmatpush1.bf16.msra.mxu0 0
  %625 = vmatprep.subr.bf16.mxu0 0
  %626 = vmatpush1.bf16.msra.mxu0 0
  %627 = vmatprep.subr.bf16.mxu0 0
  %628 = vmatpush1.bf16.msra.mxu0 0
  %629 = vmatprep.subr.bf16.mxu0 0
  %630 = vmatpush1.bf16.msra.mxu0 0
  %631 = vmatprep.subr.bf16.mxu0 0
  %632 = vmatpush1.bf16.msra.mxu0 0
  %633 = vmatprep.subr.bf16.mxu0 0
  %634 = vmatpush1.bf16.msra.mxu0 0
  %635 = vmatprep.subr.bf16.mxu0 0
  %636 = vmatpush1.bf16.msra.mxu0 0
  %637 = vmatprep.subr.bf16.mxu0 0
  %638 = vmatpush1.bf16.msra.mxu0 0
  %639 = vmatprep.subr.bf16.mxu0 0
  %640 = vmatpush1.bf16.msra.mxu0 0
  %641 = vmatprep.subr.bf16.mxu0 0
  %642 = vmatpush1.bf16.msra.mxu0 0
  %643 = vmatprep.mubr.bf16.mxu0 0
  %644 = vmatmul.mubr.bf16.gmra.mrb[0].mxu0 %v568
  %v645 = vpop.f32.mrb[0].mxu0
  %v646 = vadd.f32 %v439, %v645
  %v647 = vpop.f32.mrb[0].mxu0
  %v648 = vadd.f32 %v441, %v647
  %v649 = vpop.f32.mrb[0].mxu0
  %v650 = vpop.f32.mrb[0].mxu0
  %651 = vdwg.mxu0
  %652 = vmatprep.subr.bf16.mxu0 %v256
  %653 = vmatpush1.bf16.msra.mxu0 %v255
  %654 = vmatprep.subr.bf16.mxu0 %v265
  %655 = vmatpush1.bf16.msra.mxu0 %v264
  %656 = vmatprep.subr.bf16.mxu0 %v274
  %657 = vmatpush1.bf16.msra.mxu0 %v273
  %658 = vmatprep.subr.bf16.mxu0 %v283
  %659 = vmatpush1.bf16.msra.mxu0 %v282
  %660 = vmatprep.subr.bf16.mxu0 %v292
  %661 = vmatpush1.bf16.msra.mxu0 %v291
  %662 = vmatprep.subr.bf16.mxu0 %v301
  %663 = vmatpush1.bf16.msra.mxu0 %v300
  %664 = vmatprep.subr.bf16.mxu0 0
  %665 = vmatpush1.bf16.msra.mxu0 0
  %666 = vmatprep.subr.bf16.mxu0 0
  %667 = vmatpush1.bf16.msra.mxu0 0
  %668 = vmatprep.subr.bf16.mxu0 0
  %669 = vmatpush1.bf16.msra.mxu0 0
  %670 = vmatprep.subr.bf16.mxu0 0
  %671 = vmatpush1.bf16.msra.mxu0 0
  %672 = vmatprep.subr.bf16.mxu0 0
  %673 = vmatpush1.bf16.msra.mxu0 0
  %674 = vmatprep.subr.bf16.mxu0 0
  %675 = vmatpush1.bf16.msra.mxu0 0
  %676 = vmatprep.subr.bf16.mxu0 0
  %677 = vmatpush1.bf16.msra.mxu0 0
  %678 = vmatprep.subr.bf16.mxu0 0
  %679 = vmatpush1.bf16.msra.mxu0 0
  %680 = vmatprep.subr.bf16.mxu0 0
  %681 = vmatpush1.bf16.msra.mxu0 0
  %682 = vmatprep.subr.bf16.mxu0 0
  %683 = vmatpush1.bf16.msra.mxu0 0
  %684 = vmatprep.mubr.bf16.mxu0 0
  %685 = vmatmul.mubr.bf16.gmra.mrb[0].mxu0 %v568
  %v686 = vpop.f32.mrb[0].mxu0
  %v687 = vadd.f32 %v480, %v686
  %v688 = vpop.f32.mrb[0].mxu0
  %v689 = vadd.f32 %v482, %v688
  %v690 = vpop.f32.mrb[0].mxu0
  %v691 = vpop.f32.mrb[0].mxu0
  %692 = vdwg.mxu0
  %693 = vmatprep.subr.bf16.mxu0 %v258
  %694 = vmatpush1.bf16.msra.mxu0 %v257
  %695 = vmatprep.subr.bf16.mxu0 %v267
  %696 = vmatpush1.bf16.msra.mxu0 %v266
  %697 = vmatprep.subr.bf16.mxu0 %v276
  %698 = vmatpush1.bf16.msra.mxu0 %v275
  %699 = vmatprep.subr.bf16.mxu0 %v285
  %700 = vmatpush1.bf16.msra.mxu0 %v284
  %701 = vmatprep.subr.bf16.mxu0 %v294
  %702 = vmatpush1.bf16.msra.mxu0 %v293
  %703 = vmatprep.subr.bf16.mxu0 %v303
  %704 = vmatpush1.bf16.msra.mxu0 %v302
  %705 = vmatprep.subr.bf16.mxu0 0
  %706 = vmatpush1.bf16.msra.mxu0 0
  %707 = vmatprep.subr.bf16.mxu0 0
  %708 = vmatpush1.bf16.msra.mxu0 0
  %709 = vmatprep.subr.bf16.mxu0 0
  %710 = vmatpush1.bf16.msra.mxu0 0
  %711 = vmatprep.subr.bf16.mxu0 0
  %712 = vmatpush1.bf16.msra.mxu0 0
  %713 = vmatprep.subr.bf16.mxu0 0
  %714 = vmatpush1.bf16.msra.mxu0 0
  %715 = vmatprep.subr.bf16.mxu0 0
  %716 = vmatpush1.bf16.msra.mxu0 0
  %717 = vmatprep.subr.bf16.mxu0 0
  %718 = vmatpush1.bf16.msra.mxu0 0
  %719 = vmatprep.subr.bf16.mxu0 0
  %720 = vmatpush1.bf16.msra.mxu0 0
  %721 = vmatprep.subr.bf16.mxu0 0
  %722 = vmatpush1.bf16.msra.mxu0 0
  %723 = vmatprep.subr.bf16.mxu0 0
  %724 = vmatpush1.bf16.msra.mxu0 0
  %725 = vmatprep.mubr.bf16.mxu0 0
  %726 = vmatmul.mubr.bf16.gmra.mrb[0].mxu0 %v568
  %v727 = vpop.f32.mrb[0].mxu0
  %v728 = vadd.f32 %v521, %v727
  %v729 = vpop.f32.mrb[0].mxu0
  %v730 = vadd.f32 %v523, %v729
  %v731 = vpop.f32.mrb[0].mxu0
  %v732 = vpop.f32.mrb[0].mxu0
  %733 = vdwg.mxu0
  %734 = vmatprep.subr.bf16.mxu0 0
  %735 = vmatpush1.bf16.msra.mxu0 %v259
  %736 = vmatprep.subr.bf16.mxu0 0
  %737 = vmatpush1.bf16.msra.mxu0 %v268
  %738 = vmatprep.subr.bf16.mxu0 0
  %739 = vmatpush1.bf16.msra.mxu0 %v277
  %740 = vmatprep.subr.bf16.mxu0 0
  %741 = vmatpush1.bf16.msra.mxu0 %v286
  %742 = vmatprep.subr.bf16.mxu0 0
  %743 = vmatpush1.bf16.msra.mxu0 %v295
  %744 = vmatprep.subr.bf16.mxu0 0
  %745 = vmatpush1.bf16.msra.mxu0 %v304
  %746 = vmatprep.subr.bf16.mxu0 0
  %747 = vmatpush1.bf16.msra.mxu0 0
  %748 = vmatprep.subr.bf16.mxu0 0
  %749 = vmatpush1.bf16.msra.mxu0 0
  %750 = vmatprep.subr.bf16.mxu0 0
  %751 = vmatpush1.bf16.msra.mxu0 0
  %752 = vmatprep.subr.bf16.mxu0 0
  %753 = vmatpush1.bf16.msra.mxu0 0
  %754 = vmatprep.subr.bf16.mxu0 0
  %755 = vmatpush1.bf16.msra.mxu0 0
  %756 = vmatprep.subr.bf16.mxu0 0
  %757 = vmatpush1.bf16.msra.mxu0 0
  %758 = vmatprep.subr.bf16.mxu0 0
  %759 = vmatpush1.bf16.msra.mxu0 0
  %760 = vmatprep.subr.bf16.mxu0 0
  %761 = vmatpush1.bf16.msra.mxu0 0
  %762 = vmatprep.subr.bf16.mxu0 0
  %763 = vmatpush1.bf16.msra.mxu0 0
  %764 = vmatprep.subr.bf16.mxu0 0
  %765 = vmatpush1.bf16.msra.mxu0 0
  %766 = vmatprep.mubr.bf16.mxu0 0
  %767 = vmatmul.mubr.bf16.gmra.mrb[0].mxu0 %v568
  %v768 = vpop.f32.mrb[0].mxu0
  %v769 = vadd.f32 %v562, %v768
  %v770 = vpop.f32.mrb[0].mxu0
  %v771 = vpop.f32.mrb[0].mxu0
  %v772 = vpop.f32.mrb[0].mxu0
  %773 = vdwg.mxu0
  %v775 = vsel %vm359, %v82, 0
  %777 = vmatprep.subr.bf16.mxu0 %v252
  %778 = vmatpush1.bf16.msra.mxu0 %v251
  %779 = vmatprep.subr.bf16.mxu0 %v261
  %780 = vmatpush1.bf16.msra.mxu0 %v260
  %781 = vmatprep.subr.bf16.mxu0 %v270
  %782 = vmatpush1.bf16.msra.mxu0 %v269
  %783 = vmatprep.subr.bf16.mxu0 %v279
  %784 = vmatpush1.bf16.msra.mxu0 %v278
  %785 = vmatprep.subr.bf16.mxu0 %v288
  %786 = vmatpush1.bf16.msra.mxu0 %v287
  %787 = vmatprep.subr.bf16.mxu0 %v297
  %788 = vmatpush1.bf16.msra.mxu0 %v296
  %789 = vmatprep.subr.bf16.mxu0 0
  %790 = vmatpush1.bf16.msra.mxu0 0
  %791 = vmatprep.subr.bf16.mxu0 0
  %792 = vmatpush1.bf16.msra.mxu0 0
  %793 = vmatprep.subr.bf16.mxu0 0
  %794 = vmatpush1.bf16.msra.mxu0 0
  %795 = vmatprep.subr.bf16.mxu0 0
  %796 = vmatpush1.bf16.msra.mxu0 0
  %797 = vmatprep.subr.bf16.mxu0 0
  %798 = vmatpush1.bf16.msra.mxu0 0
  %799 = vmatprep.subr.bf16.mxu0 0
  %800 = vmatpush1.bf16.msra.mxu0 0
  %801 = vmatprep.subr.bf16.mxu0 0
  %802 = vmatpush1.bf16.msra.mxu0 0
  %803 = vmatprep.subr.bf16.mxu0 0
  %804 = vmatpush1.bf16.msra.mxu0 0
  %805 = vmatprep.subr.bf16.mxu0 0
  %806 = vmatpush1.bf16.msra.mxu0 0
  %807 = vmatprep.subr.bf16.mxu0 0
  %808 = vmatpush1.bf16.msra.mxu0 0
  %809 = vmatprep.mubr.bf16.mxu0 0
  %810 = vmatmul.mubr.bf16.gmra.mrb[0].mxu0 %v775
  %v811 = vpop.f32.mrb[0].mxu0
  %v812 = vadd.f32 0.0, %v811
  %v813 = vpop.f32.mrb[0].mxu0
  %v814 = vadd.f32 0.0, %v813
  %v815 = vpop.f32.mrb[0].mxu0
  %v816 = vpop.f32.mrb[0].mxu0
  %817 = vdwg.mxu0
  %818 = vmatprep.subr.bf16.mxu0 %v254
  %819 = vmatpush1.bf16.msra.mxu0 %v253
  %820 = vmatprep.subr.bf16.mxu0 %v263
  %821 = vmatpush1.bf16.msra.mxu0 %v262
  %822 = vmatprep.subr.bf16.mxu0 %v272
  %823 = vmatpush1.bf16.msra.mxu0 %v271
  %824 = vmatprep.subr.bf16.mxu0 %v281
  %825 = vmatpush1.bf16.msra.mxu0 %v280
  %826 = vmatprep.subr.bf16.mxu0 %v290
  %827 = vmatpush1.bf16.msra.mxu0 %v289
  %828 = vmatprep.subr.bf16.mxu0 %v299
  %829 = vmatpush1.bf16.msra.mxu0 %v298
  %830 = vmatprep.subr.bf16.mxu0 0
  %831 = vmatpush1.bf16.msra.mxu0 0
  %832 = vmatprep.subr.bf16.mxu0 0
  %833 = vmatpush1.bf16.msra.mxu0 0
  %834 = vmatprep.subr.bf16.mxu0 0
  %835 = vmatpush1.bf16.msra.mxu0 0
  %836 = vmatprep.subr.bf16.mxu0 0
  %837 = vmatpush1.bf16.msra.mxu0 0
  %838 = vmatprep.subr.bf16.mxu0 0
  %839 = vmatpush1.bf16.msra.mxu0 0
  %840 = vmatprep.subr.bf16.mxu0 0
  %841 = vmatpush1.bf16.msra.mxu0 0
  %842 = vmatprep.subr.bf16.mxu0 0
  %843 = vmatpush1.bf16.msra.mxu0 0
  %844 = vmatprep.subr.bf16.mxu0 0
  %845 = vmatpush1.bf16.msra.mxu0 0
  %846 = vmatprep.subr.bf16.mxu0 0
  %847 = vmatpush1.bf16.msra.mxu0 0
  %848 = vmatprep.subr.bf16.mxu0 0
  %849 = vmatpush1.bf16.msra.mxu0 0
  %850 = vmatprep.mubr.bf16.mxu0 0
  %851 = vmatmul.mubr.bf16.gmra.mrb[0].mxu0 %v775
  %v852 = vpop.f32.mrb[0].mxu0
  %v853 = vadd.f32 0.0, %v852
  %v854 = vpop.f32.mrb[0].mxu0
  %v855 = vadd.f32 0.0, %v854
  %v856 = vpop.f32.mrb[0].mxu0
  %v857 = vpop.f32.mrb[0].mxu0
  %858 = vdwg.mxu0
  %859 = vmatprep.subr.bf16.mxu0 %v256
  %860 = vmatpush1.bf16.msra.mxu0 %v255
  %861 = vmatprep.subr.bf16.mxu0 %v265
  %862 = vmatpush1.bf16.msra.mxu0 %v264
  %863 = vmatprep.subr.bf16.mxu0 %v274
  %864 = vmatpush1.bf16.msra.mxu0 %v273
  %865 = vmatprep.subr.bf16.mxu0 %v283
  %866 = vmatpush1.bf16.msra.mxu0 %v282
  %867 = vmatprep.subr.bf16.mxu0 %v292
  %868 = vmatpush1.bf16.msra.mxu0 %v291
  %869 = vmatprep.subr.bf16.mxu0 %v301
  %870 = vmatpush1.bf16.msra.mxu0 %v300
  %871 = vmatprep.subr.bf16.mxu0 0
  %872 = vmatpush1.bf16.msra.mxu0 0
  %873 = vmatprep.subr.bf16.mxu0 0
  %874 = vmatpush1.bf16.msra.mxu0 0
  %875 = vmatprep.subr.bf16.mxu0 0
  %876 = vmatpush1.bf16.msra.mxu0 0
  %877 = vmatprep.subr.bf16.mxu0 0
  %878 = vmatpush1.bf16.msra.mxu0 0
  %879 = vmatprep.subr.bf16.mxu0 0
  %880 = vmatpush1.bf16.msra.mxu0 0
  %881 = vmatprep.subr.bf16.mxu0 0
  %882 = vmatpush1.bf16.msra.mxu0 0
  %883 = vmatprep.subr.bf16.mxu0 0
  %884 = vmatpush1.bf16.msra.mxu0 0
  %885 = vmatprep.subr.bf16.mxu0 0
  %886 = vmatpush1.bf16.msra.mxu0 0
  %887 = vmatprep.subr.bf16.mxu0 0
  %888 = vmatpush1.bf16.msra.mxu0 0
  %889 = vmatprep.subr.bf16.mxu0 0
  %890 = vmatpush1.bf16.msra.mxu0 0
  %891 = vmatprep.mubr.bf16.mxu0 0
  %892 = vmatmul.mubr.bf16.gmra.mrb[0].mxu0 %v775
  %v893 = vpop.f32.mrb[0].mxu0
  %v894 = vadd.f32 0.0, %v893
  %v895 = vpop.f32.mrb[0].mxu0
  %v896 = vadd.f32 0.0, %v895
  %v897 = vpop.f32.mrb[0].mxu0
  %v898 = vpop.f32.mrb[0].mxu0
  %899 = vdwg.mxu0
  %900 = vmatprep.subr.bf16.mxu0 %v258
  %901 = vmatpush1.bf16.msra.mxu0 %v257
  %902 = vmatprep.subr.bf16.mxu0 %v267
  %903 = vmatpush1.bf16.msra.mxu0 %v266
  %904 = vmatprep.subr.bf16.mxu0 %v276
  %905 = vmatpush1.bf16.msra.mxu0 %v275
  %906 = vmatprep.subr.bf16.mxu0 %v285
  %907 = vmatpush1.bf16.msra.mxu0 %v284
  %908 = vmatprep.subr.bf16.mxu0 %v294
  %909 = vmatpush1.bf16.msra.mxu0 %v293
  %910 = vmatprep.subr.bf16.mxu0 %v303
  %911 = vmatpush1.bf16.msra.mxu0 %v302
  %912 = vmatprep.subr.bf16.mxu0 0
  %913 = vmatpush1.bf16.msra.mxu0 0
  %914 = vmatprep.subr.bf16.mxu0 0
  %915 = vmatpush1.bf16.msra.mxu0 0
  %916 = vmatprep.subr.bf16.mxu0 0
  %917 = vmatpush1.bf16.msra.mxu0 0
  %918 = vmatprep.subr.bf16.mxu0 0
  %919 = vmatpush1.bf16.msra.mxu0 0
  %920 = vmatprep.subr.bf16.mxu0 0
  %921 = vmatpush1.bf16.msra.mxu0 0
  %922 = vmatprep.subr.bf16.mxu0 0
  %923 = vmatpush1.bf16.msra.mxu0 0
  %924 = vmatprep.subr.bf16.mxu0 0
  %925 = vmatpush1.bf16.msra.mxu0 0
  %926 = vmatprep.subr.bf16.mxu0 0
  %927 = vmatpush1.bf16.msra.mxu0 0
  %928 = vmatprep.subr.bf16.mxu0 0
  %929 = vmatpush1.bf16.msra.mxu0 0
  %930 = vmatprep.subr.bf16.mxu0 0
  %931 = vmatpush1.bf16.msra.mxu0 0
  %932 = vmatprep.mubr.bf16.mxu0 0
  %933 = vmatmul.mubr.bf16.gmra.mrb[0].mxu0 %v775
  %v934 = vpop.f32.mrb[0].mxu0
  %v935 = vadd.f32 0.0, %v934
  %v936 = vpop.f32.mrb[0].mxu0
  %v937 = vadd.f32 0.0, %v936
  %v938 = vpop.f32.mrb[0].mxu0
  %v939 = vpop.f32.mrb[0].mxu0
  %940 = vdwg.mxu0
  %941 = vmatprep.subr.bf16.mxu0 0
  %942 = vmatpush1.bf16.msra.mxu0 %v259
  %943 = vmatprep.subr.bf16.mxu0 0
  %944 = vmatpush1.bf16.msra.mxu0 %v268
  %945 = vmatprep.subr.bf16.mxu0 0
  %946 = vmatpush1.bf16.msra.mxu0 %v277
  %947 = vmatprep.subr.bf16.mxu0 0
  %948 = vmatpush1.bf16.msra.mxu0 %v286
  %949 = vmatprep.subr.bf16.mxu0 0
  %950 = vmatpush1.bf16.msra.mxu0 %v295
  %951 = vmatprep.subr.bf16.mxu0 0
  %952 = vmatpush1.bf16.msra.mxu0 %v304
  %953 = vmatprep.subr.bf16.mxu0 0
  %954 = vmatpush1.bf16.msra.mxu0 0
  %955 = vmatprep.subr.bf16.mxu0 0
  %956 = vmatpush1.bf16.msra.mxu0 0
  %957 = vmatprep.subr.bf16.mxu0 0
  %958 = vmatpush1.bf16.msra.mxu0 0
  %959 = vmatprep.subr.bf16.mxu0 0
  %960 = vmatpush1.bf16.msra.mxu0 0
  %961 = vmatprep.subr.bf16.mxu0 0
  %962 = vmatpush1.bf16.msra.mxu0 0
  %963 = vmatprep.subr.bf16.mxu0 0
  %964 = vmatpush1.bf16.msra.mxu0 0
  %965 = vmatprep.subr.bf16.mxu0 0
  %966 = vmatpush1.bf16.msra.mxu0 0
  %967 = vmatprep.subr.bf16.mxu0 0
  %968 = vmatpush1.bf16.msra.mxu0 0
  %969 = vmatprep.subr.bf16.mxu0 0
  %970 = vmatpush1.bf16.msra.mxu0 0
  %971 = vmatprep.subr.bf16.mxu0 0
  %972 = vmatpush1.bf16.msra.mxu0 0
  %973 = vmatprep.mubr.bf16.mxu0 0
  %974 = vmatmul.mubr.bf16.gmra.mrb[0].mxu0 %v775
  %v975 = vpop.f32.mrb[0].mxu0
  %v976 = vadd.f32 0.0, %v975
  %v977 = vpop.f32.mrb[0].mxu0
  %v978 = vpop.f32.mrb[0].mxu0
  %v979 = vpop.f32.mrb[0].mxu0
  %980 = vdwg.mxu0
  %v981 = vadd.f32 %v605, %v812
  %v982 = vadd.f32 %v607, %v814
  %v983 = vadd.f32 %v646, %v853
  %v984 = vadd.f32 %v648, %v855
  %v985 = vadd.f32 %v687, %v894
  %v986 = vadd.f32 %v689, %v896
  %v987 = vadd.f32 %v728, %v935
  %v988 = vadd.f32 %v730, %v937
  %v989 = vadd.f32 %v769, %v976
  %v990 = vld [vmem:[%s2] sm:$0xff]
  %v991 = vld [vmem:[%s2 + $0x8] sm:$0x1]
  %v994 = vlaneseq
  %v995 = vshrl.u32 %v994, 7
  %v996 = vsub.s32 0, %v995
  %v997 = vrot.slane %v990, %v996
  %v998 = vlaneseq
  %v999 = vshrl.u32 %v998, 7
  %v1000 = vsub.s32 1, %v999
  %v1001 = vrot.slane %v990, %v1000
  %v1002 = vlaneseq
  %v1003 = vshrl.u32 %v1002, 7
  %v1004 = vsub.s32 2, %v1003
  %v1005 = vrot.slane %v990, %v1004
  %v1006 = vlaneseq
  %v1007 = vshrl.u32 %v1006, 7
  %v1008 = vsub.s32 3, %v1007
  %v1009 = vrot.slane %v990, %v1008
  %v1010 = vlaneseq
  %v1011 = vshrl.u32 %v1010, 7
  %v1012 = vsub.s32 4, %v1011
  %v1013 = vrot.slane %v990, %v1012
  %v1014 = vlaneseq
  %v1015 = vshrl.u32 %v1014, 7
  %v1016 = vsub.s32 5, %v1015
  %v1017 = vrot.slane %v990, %v1016
  %v1018 = vlaneseq
  %v1019 = vshrl.u32 %v1018, 7
  %v1020 = vsub.s32 6, %v1019
  %v1021 = vrot.slane %v990, %v1020
  %v1022 = vlaneseq
  %v1023 = vshrl.u32 %v1022, 7
  %v1024 = vsub.s32 7, %v1023
  %v1025 = vrot.slane %v990, %v1024
  %v1026 = vlaneseq
  %v1027 = vshrl.u32 %v1026, 7
  %v1028 = vsub.s32 0, %v1027
  %v1029 = vrot.slane %v991, %v1028
  %v1039 = vadd.f32 %v981, %v997
  %v1040 = vadd.f32 %v982, %v1001
  %v1041 = vadd.f32 %v983, %v1005
  %v1042 = vadd.f32 %v984, %v1009
  %v1043 = vadd.f32 %v985, %v1013
  %v1044 = vadd.f32 %v986, %v1017
  %v1045 = vadd.f32 %v987, %v1021
  %v1046 = vadd.f32 %v988, %v1025
  %v1047 = vadd.f32 %v989, %v1029
  %v1048 = vand.u32 2147483647, %v1039
  %vm1049 = vcmp.le.f32.partialorder %v1048, 0.7853982
  %vm1050 = vcmp.lt.s32.totalorder %v1039, 0
  %v1051 = vand.u32 %v1039, 2139095040
  %v1052 = vshrl.u32 %v1051, 23
  %v1053 = vsub.s32 %v1052, 127
  %v1054 = vand.u32 2147483647, %v1039
  %v1055 = vand.u32 %v1054, 8388607
  %v1056 = vor.u32 %v1055, 8388608
  %v1057 = vsub.s32 0, %v1056
  %v1058 = vadd.s32 %v1053, 1
  %vm1059 = vcmp.gt.s32.totalorder %v1058, 0
  %v1060 = vsel %vm1059, %v1058, 0
  %v1061 = vshrl.u32 %v1060, 5
  %v1062 = vand.u32 %v1060, 31
  %v1063 = vsub.s32 32, %v1062
  %v1064 = vshrl.u32 683565275, %v1063
  %v1065 = vshll.u32 683565275, %v1062
  %v1066 = vshrl.u32 2475754826, %v1063
  %v1067 = vor.u32 %v1065, %v1066
  %v1068 = vshll.u32 2475754826, %v1062
  %v1069 = vshrl.u32 2131351028, %v1063
  %v1070 = vor.u32 %v1068, %v1069
  %v1071 = vshll.u32 2131351028, %v1062
  %v1072 = vshrl.u32 2102212464, %v1063
  %v1073 = vor.u32 %v1071, %v1072
  %v1074 = vshll.u32 2102212464, %v1062
  %v1075 = vshrl.u32 920167782, %v1063
  %v1076 = vor.u32 %v1074, %v1075
  %v1077 = vshll.u32 920167782, %v1062
  %v1078 = vshrl.u32 1326507024, %v1063
  %v1079 = vor.u32 %v1077, %v1078
  %vm1080 = vcmp.lt.s32.totalorder %v1061, 1
  %vm1081 = vcmp.lt.s32.totalorder %v1061, 2
  %vm1082 = vcmp.lt.s32.totalorder %v1061, 3
  %vm1083 = vcmp.lt.s32.totalorder %v1061, 4
  %v1084 = vsel %vm1080, %v1064, %v1067
  %v1085 = vsel %vm1083, %v1073, 2102212464
  %v1086 = vsel %vm1082, %v1070, %v1085
  %v1087 = vsel %vm1081, %v1084, %v1086
  %v1088 = vsel %vm1080, %v1067, %v1070
  %v1089 = vsel %vm1083, %v1076, 920167782
  %v1090 = vsel %vm1082, %v1073, %v1089
  %v1091 = vsel %vm1081, %v1088, %v1090
  %v1092 = vsel %vm1080, %v1070, %v1073
  %v1093 = vsel %vm1083, %v1079, 1326507024
  %v1094 = vsel %vm1082, %v1076, %v1093
  %v1095 = vsel %vm1081, %v1092, %v1094
  %v1096 = vshll.u32 %v1056, 8
  %v1097 = vmul.u32.u64.compose %v1096, %v1095
  %v1098 = vextract.low.u32 %v1097
  %v1099 = vextract.high.u32 %v1097
  %v1100 = vmul.u32.u64.compose %v1096, %v1091
  %v1101 = vextract.low.u32 %v1100
  %v1102 = vextract.high.u32 %v1100
  %v1103 = vmul.u32 %v1096, %v1087
  %v1104 = vadd.s32 %v1099, %v1101
  %vm1105 = vc.u32 %v1099, %v1101
  %v1106 = vadd.s32 %v1102, 1
  %v1107 = vsel %vm1105, %v1106, %v1102
  %v1108 = vadd.s32 %v1103, %v1107
  %v1109 = vadd.s32 %v1108, 536870912
  %v1110 = vshrl.u32 %v1109, 30
  %v1111 = vshll.u32 %v1110, 30
  %v1112 = vsub.s32 %v1108, %v1111
  %vm1113 = vcmp.lt.s32.totalorder %v1112, 0
  %v1114 = vsub.s32 0, %v1112
  %v1115 = vsel %vm1113, %v1114, %v1112
  %v1116 = vclz %v1115
  %v1117 = vsub.s32 %v1116, 2
  %vm1118 = vcmp.gt.s32.totalorder 0, %v1117
  %v1119 = vsel %vm1118, 0, %v1117
  %v1120 = vsub.s32 32, %v1119
  %v1121 = vshll.u32 %v1112, %v1119
  %v1122 = vshrl.u32 %v1104, %v1120
  %v1123 = vor.u32 %v1121, %v1122
  %v1124 = vsub.s32 4294967266, %v1119
  %v1125 = vadd.s32 %v1124, 127
  %v1126 = vshll.u32 %v1125, 23
  %v1127 = vor.u32 4788187, %v1126
  %v1128 = vand.u32 2147483647, %v1127
  %v1130 = vcvt.s32.f32 %v1123
  %v1131 = vmul.f32 %v1130, %v1128
  %v1132 = vxor.u32 %v1131, 2147483648
  %v1133 = vsel %vm1050, %v1132, %v1131
  %v1134 = vsub.s32 4, %v1110
  %v1135 = vsel %vm1050, %v1134, %v1110
  %v1136 = vsel %vm1049, %v1039, %v1133
  %v1137 = vsel %vm1049, 0, %v1135
  %v1138 = vcosq.f32.pop %v1136
  %v1139 = vsinq.f32.pop %v1136
  %vm1140 = vweird.f32 %v1039
  %v1141 = vadd.s32 %v1137, 3
  %v1142 = vand.u32 %v1141, 3
  %vm1143 = vcmp.lt.s32.totalorder %v1142, 2
  %vm1144 = vcmp.eq.s32.totalorder %v1142, 0
  %v1145 = vxor.u32 %v1139, 2147483648
  %v1146 = vsel %vm1144, %v1138, %v1145
  %vm1147 = vcmp.eq.s32.totalorder %v1142, 2
  %v1148 = vxor.u32 %v1138, 2147483648
  %v1149 = vsel %vm1147, %v1148, %v1139
  %v1150 = vsel %vm1143, %v1146, %v1149
  %v1151 = vsel %vm1140, nan, %v1150
  %v1152 = vand.u32 2147483647, %v1040
  %vm1153 = vcmp.le.f32.partialorder %v1152, 0.7853982
  %vm1154 = vcmp.lt.s32.totalorder %v1040, 0
  %v1155 = vand.u32 %v1040, 2139095040
  %v1156 = vshrl.u32 %v1155, 23
  %v1157 = vsub.s32 %v1156, 127
  %v1158 = vand.u32 2147483647, %v1040
  %v1159 = vand.u32 %v1158, 8388607
  %v1160 = vor.u32 %v1159, 8388608
  %v1161 = vsub.s32 0, %v1160
  %v1162 = vadd.s32 %v1157, 1
  %vm1163 = vcmp.gt.s32.totalorder %v1162, 0
  %v1164 = vsel %vm1163, %v1162, 0
  %v1165 = vshrl.u32 %v1164, 5
  %v1166 = vand.u32 %v1164, 31
  %v1167 = vsub.s32 32, %v1166
  %v1168 = vshrl.u32 683565275, %v1167
  %v1169 = vshll.u32 683565275, %v1166
  %v1170 = vshrl.u32 2475754826, %v1167
  %v1171 = vor.u32 %v1169, %v1170
  %v1172 = vshll.u32 2475754826, %v1166
  %v1173 = vshrl.u32 2131351028, %v1167
  %v1174 = vor.u32 %v1172, %v1173
  %v1175 = vshll.u32 2131351028, %v1166
  %v1176 = vshrl.u32 2102212464, %v1167
  %v1177 = vor.u32 %v1175, %v1176
  %v1178 = vshll.u32 2102212464, %v1166
  %v1179 = vshrl.u32 920167782, %v1167
  %v1180 = vor.u32 %v1178, %v1179
  %v1181 = vshll.u32 920167782, %v1166
  %v1182 = vshrl.u32 1326507024, %v1167
  %v1183 = vor.u32 %v1181, %v1182
  %vm1184 = vcmp.lt.s32.totalorder %v1165, 1
  %vm1185 = vcmp.lt.s32.totalorder %v1165, 2
  %vm1186 = vcmp.lt.s32.totalorder %v1165, 3
  %vm1187 = vcmp.lt.s32.totalorder %v1165, 4
  %v1188 = vsel %vm1184, %v1168, %v1171
  %v1189 = vsel %vm1187, %v1177, 2102212464
  %v1190 = vsel %vm1186, %v1174, %v1189
  %v1191 = vsel %vm1185, %v1188, %v1190
  %v1192 = vsel %vm1184, %v1171, %v1174
  %v1193 = vsel %vm1187, %v1180, 920167782
  %v1194 = vsel %vm1186, %v1177, %v1193
  %v1195 = vsel %vm1185, %v1192, %v1194
  %v1196 = vsel %vm1184, %v1174, %v1177
  %v1197 = vsel %vm1187, %v1183, 1326507024
  %v1198 = vsel %vm1186, %v1180, %v1197
  %v1199 = vsel %vm1185, %v1196, %v1198
  %v1200 = vshll.u32 %v1160, 8
  %v1201 = vmul.u32.u64.compose %v1200, %v1199
  %v1202 = vextract.low.u32 %v1201
  %v1203 = vextract.high.u32 %v1201
  %v1204 = vmul.u32.u64.compose %v1200, %v1195
  %v1205 = vextract.low.u32 %v1204
  %v1206 = vextract.high.u32 %v1204
  %v1207 = vmul.u32 %v1200, %v1191
  %v1208 = vadd.s32 %v1203, %v1205
  %vm1209 = vc.u32 %v1203, %v1205
  %v1210 = vadd.s32 %v1206, 1
  %v1211 = vsel %vm1209, %v1210, %v1206
  %v1212 = vadd.s32 %v1207, %v1211
  %v1213 = vadd.s32 %v1212, 536870912
  %v1214 = vshrl.u32 %v1213, 30
  %v1215 = vshll.u32 %v1214, 30
  %v1216 = vsub.s32 %v1212, %v1215
  %vm1217 = vcmp.lt.s32.totalorder %v1216, 0
  %v1218 = vsub.s32 0, %v1216
  %v1219 = vsel %vm1217, %v1218, %v1216
  %v1220 = vclz %v1219
  %v1221 = vsub.s32 %v1220, 2
  %vm1222 = vcmp.gt.s32.totalorder 0, %v1221
  %v1223 = vsel %vm1222, 0, %v1221
  %v1224 = vsub.s32 32, %v1223
  %v1225 = vshll.u32 %v1216, %v1223
  %v1226 = vshrl.u32 %v1208, %v1224
  %v1227 = vor.u32 %v1225, %v1226
  %v1228 = vsub.s32 4294967266, %v1223
  %v1229 = vadd.s32 %v1228, 127
  %v1230 = vshll.u32 %v1229, 23
  %v1231 = vor.u32 4788187, %v1230
  %v1232 = vand.u32 2147483647, %v1231
  %v1234 = vcvt.s32.f32 %v1227
  %v1235 = vmul.f32 %v1234, %v1232
  %v1236 = vxor.u32 %v1235, 2147483648
  %v1237 = vsel %vm1154, %v1236, %v1235
  %v1238 = vsub.s32 4, %v1214
  %v1239 = vsel %vm1154, %v1238, %v1214
  %v1240 = vsel %vm1153, %v1040, %v1237
  %v1241 = vsel %vm1153, 0, %v1239
  %v1242 = vcosq.f32.pop %v1240
  %v1243 = vsinq.f32.pop %v1240
  %vm1244 = vweird.f32 %v1040
  %v1245 = vadd.s32 %v1241, 3
  %v1246 = vand.u32 %v1245, 3
  %vm1247 = vcmp.lt.s32.totalorder %v1246, 2
  %vm1248 = vcmp.eq.s32.totalorder %v1246, 0
  %v1249 = vxor.u32 %v1243, 2147483648
  %v1250 = vsel %vm1248, %v1242, %v1249
  %vm1251 = vcmp.eq.s32.totalorder %v1246, 2
  %v1252 = vxor.u32 %v1242, 2147483648
  %v1253 = vsel %vm1251, %v1252, %v1243
  %v1254 = vsel %vm1247, %v1250, %v1253
  %v1255 = vsel %vm1244, nan, %v1254
  %v1256 = vand.u32 2147483647, %v1041
  %vm1257 = vcmp.le.f32.partialorder %v1256, 0.7853982
  %vm1258 = vcmp.lt.s32.totalorder %v1041, 0
  %v1259 = vand.u32 %v1041, 2139095040
  %v1260 = vshrl.u32 %v1259, 23
  %v1261 = vsub.s32 %v1260, 127
  %v1262 = vand.u32 2147483647, %v1041
  %v1263 = vand.u32 %v1262, 8388607
  %v1264 = vor.u32 %v1263, 8388608
  %v1265 = vsub.s32 0, %v1264
  %v1266 = vadd.s32 %v1261, 1
  %vm1267 = vcmp.gt.s32.totalorder %v1266, 0
  %v1268 = vsel %vm1267, %v1266, 0
  %v1269 = vshrl.u32 %v1268, 5
  %v1270 = vand.u32 %v1268, 31
  %v1271 = vsub.s32 32, %v1270
  %v1272 = vshrl.u32 683565275, %v1271
  %v1273 = vshll.u32 683565275, %v1270
  %v1274 = vshrl.u32 2475754826, %v1271
  %v1275 = vor.u32 %v1273, %v1274
  %v1276 = vshll.u32 2475754826, %v1270
  %v1277 = vshrl.u32 2131351028, %v1271
  %v1278 = vor.u32 %v1276, %v1277
  %v1279 = vshll.u32 2131351028, %v1270
  %v1280 = vshrl.u32 2102212464, %v1271
  %v1281 = vor.u32 %v1279, %v1280
  %v1282 = vshll.u32 2102212464, %v1270
  %v1283 = vshrl.u32 920167782, %v1271
  %v1284 = vor.u32 %v1282, %v1283
  %v1285 = vshll.u32 920167782, %v1270
  %v1286 = vshrl.u32 1326507024, %v1271
  %v1287 = vor.u32 %v1285, %v1286
  %vm1288 = vcmp.lt.s32.totalorder %v1269, 1
  %vm1289 = vcmp.lt.s32.totalorder %v1269, 2
  %vm1290 = vcmp.lt.s32.totalorder %v1269, 3
  %vm1291 = vcmp.lt.s32.totalorder %v1269, 4
  %v1292 = vsel %vm1288, %v1272, %v1275
  %v1293 = vsel %vm1291, %v1281, 2102212464
  %v1294 = vsel %vm1290, %v1278, %v1293
  %v1295 = vsel %vm1289, %v1292, %v1294
  %v1296 = vsel %vm1288, %v1275, %v1278
  %v1297 = vsel %vm1291, %v1284, 920167782
  %v1298 = vsel %vm1290, %v1281, %v1297
  %v1299 = vsel %vm1289, %v1296, %v1298
  %v1300 = vsel %vm1288, %v1278, %v1281
  %v1301 = vsel %vm1291, %v1287, 1326507024
  %v1302 = vsel %vm1290, %v1284, %v1301
  %v1303 = vsel %vm1289, %v1300, %v1302
  %v1304 = vshll.u32 %v1264, 8
  %v1305 = vmul.u32.u64.compose %v1304, %v1303
  %v1306 = vextract.low.u32 %v1305
  %v1307 = vextract.high.u32 %v1305
  %v1308 = vmul.u32.u64.compose %v1304, %v1299
  %v1309 = vextract.low.u32 %v1308
  %v1310 = vextract.high.u32 %v1308
  %v1311 = vmul.u32 %v1304, %v1295
  %v1312 = vadd.s32 %v1307, %v1309
  %vm1313 = vc.u32 %v1307, %v1309
  %v1314 = vadd.s32 %v1310, 1
  %v1315 = vsel %vm1313, %v1314, %v1310
  %v1316 = vadd.s32 %v1311, %v1315
  %v1317 = vadd.s32 %v1316, 536870912
  %v1318 = vshrl.u32 %v1317, 30
  %v1319 = vshll.u32 %v1318, 30
  %v1320 = vsub.s32 %v1316, %v1319
  %vm1321 = vcmp.lt.s32.totalorder %v1320, 0
  %v1322 = vsub.s32 0, %v1320
  %v1323 = vsel %vm1321, %v1322, %v1320
  %v1324 = vclz %v1323
  %v1325 = vsub.s32 %v1324, 2
  %vm1326 = vcmp.gt.s32.totalorder 0, %v1325
  %v1327 = vsel %vm1326, 0, %v1325
  %v1328 = vsub.s32 32, %v1327
  %v1329 = vshll.u32 %v1320, %v1327
  %v1330 = vshrl.u32 %v1312, %v1328
  %v1331 = vor.u32 %v1329, %v1330
  %v1332 = vsub.s32 4294967266, %v1327
  %v1333 = vadd.s32 %v1332, 127
  %v1334 = vshll.u32 %v1333, 23
  %v1335 = vor.u32 4788187, %v1334
  %v1336 = vand.u32 2147483647, %v1335
  %v1338 = vcvt.s32.f32 %v1331
  %v1339 = vmul.f32 %v1338, %v1336
  %v1340 = vxor.u32 %v1339, 2147483648
  %v1341 = vsel %vm1258, %v1340, %v1339
  %v1342 = vsub.s32 4, %v1318
  %v1343 = vsel %vm1258, %v1342, %v1318
  %v1344 = vsel %vm1257, %v1041, %v1341
  %v1345 = vsel %vm1257, 0, %v1343
  %v1346 = vcosq.f32.pop %v1344
  %v1347 = vsinq.f32.pop %v1344
  %vm1348 = vweird.f32 %v1041
  %v1349 = vadd.s32 %v1345, 3
  %v1350 = vand.u32 %v1349, 3
  %vm1351 = vcmp.lt.s32.totalorder %v1350, 2
  %vm1352 = vcmp.eq.s32.totalorder %v1350, 0
  %v1353 = vxor.u32 %v1347, 2147483648
  %v1354 = vsel %vm1352, %v1346, %v1353
  %vm1355 = vcmp.eq.s32.totalorder %v1350, 2
  %v1356 = vxor.u32 %v1346, 2147483648
  %v1357 = vsel %vm1355, %v1356, %v1347
  %v1358 = vsel %vm1351, %v1354, %v1357
  %v1359 = vsel %vm1348, nan, %v1358
  %v1360 = vand.u32 2147483647, %v1042
  %vm1361 = vcmp.le.f32.partialorder %v1360, 0.7853982
  %vm1362 = vcmp.lt.s32.totalorder %v1042, 0
  %v1363 = vand.u32 %v1042, 2139095040
  %v1364 = vshrl.u32 %v1363, 23
  %v1365 = vsub.s32 %v1364, 127
  %v1366 = vand.u32 2147483647, %v1042
  %v1367 = vand.u32 %v1366, 8388607
  %v1368 = vor.u32 %v1367, 8388608
  %v1369 = vsub.s32 0, %v1368
  %v1370 = vadd.s32 %v1365, 1
  %vm1371 = vcmp.gt.s32.totalorder %v1370, 0
  %v1372 = vsel %vm1371, %v1370, 0
  %v1373 = vshrl.u32 %v1372, 5
  %v1374 = vand.u32 %v1372, 31
  %v1375 = vsub.s32 32, %v1374
  %v1376 = vshrl.u32 683565275, %v1375
  %v1377 = vshll.u32 683565275, %v1374
  %v1378 = vshrl.u32 2475754826, %v1375
  %v1379 = vor.u32 %v1377, %v1378
  %v1380 = vshll.u32 2475754826, %v1374
  %v1381 = vshrl.u32 2131351028, %v1375
  %v1382 = vor.u32 %v1380, %v1381
  %v1383 = vshll.u32 2131351028, %v1374
  %v1384 = vshrl.u32 2102212464, %v1375
  %v1385 = vor.u32 %v1383, %v1384
  %v1386 = vshll.u32 2102212464, %v1374
  %v1387 = vshrl.u32 920167782, %v1375
  %v1388 = vor.u32 %v1386, %v1387
  %v1389 = vshll.u32 920167782, %v1374
  %v1390 = vshrl.u32 1326507024, %v1375
  %v1391 = vor.u32 %v1389, %v1390
  %vm1392 = vcmp.lt.s32.totalorder %v1373, 1
  %vm1393 = vcmp.lt.s32.totalorder %v1373, 2
  %vm1394 = vcmp.lt.s32.totalorder %v1373, 3
  %vm1395 = vcmp.lt.s32.totalorder %v1373, 4
  %v1396 = vsel %vm1392, %v1376, %v1379
  %v1397 = vsel %vm1395, %v1385, 2102212464
  %v1398 = vsel %vm1394, %v1382, %v1397
  %v1399 = vsel %vm1393, %v1396, %v1398
  %v1400 = vsel %vm1392, %v1379, %v1382
  %v1401 = vsel %vm1395, %v1388, 920167782
  %v1402 = vsel %vm1394, %v1385, %v1401
  %v1403 = vsel %vm1393, %v1400, %v1402
  %v1404 = vsel %vm1392, %v1382, %v1385
  %v1405 = vsel %vm1395, %v1391, 1326507024
  %v1406 = vsel %vm1394, %v1388, %v1405
  %v1407 = vsel %vm1393, %v1404, %v1406
  %v1408 = vshll.u32 %v1368, 8
  %v1409 = vmul.u32.u64.compose %v1408, %v1407
  %v1410 = vextract.low.u32 %v1409
  %v1411 = vextract.high.u32 %v1409
  %v1412 = vmul.u32.u64.compose %v1408, %v1403
  %v1413 = vextract.low.u32 %v1412
  %v1414 = vextract.high.u32 %v1412
  %v1415 = vmul.u32 %v1408, %v1399
  %v1416 = vadd.s32 %v1411, %v1413
  %vm1417 = vc.u32 %v1411, %v1413
  %v1418 = vadd.s32 %v1414, 1
  %v1419 = vsel %vm1417, %v1418, %v1414
  %v1420 = vadd.s32 %v1415, %v1419
  %v1421 = vadd.s32 %v1420, 536870912
  %v1422 = vshrl.u32 %v1421, 30
  %v1423 = vshll.u32 %v1422, 30
  %v1424 = vsub.s32 %v1420, %v1423
  %vm1425 = vcmp.lt.s32.totalorder %v1424, 0
  %v1426 = vsub.s32 0, %v1424
  %v1427 = vsel %vm1425, %v1426, %v1424
  %v1428 = vclz %v1427
  %v1429 = vsub.s32 %v1428, 2
  %vm1430 = vcmp.gt.s32.totalorder 0, %v1429
  %v1431 = vsel %vm1430, 0, %v1429
  %v1432 = vsub.s32 32, %v1431
  %v1433 = vshll.u32 %v1424, %v1431
  %v1434 = vshrl.u32 %v1416, %v1432
  %v1435 = vor.u32 %v1433, %v1434
  %v1436 = vsub.s32 4294967266, %v1431
  %v1437 = vadd.s32 %v1436, 127
  %v1438 = vshll.u32 %v1437, 23
  %v1439 = vor.u32 4788187, %v1438
  %v1440 = vand.u32 2147483647, %v1439
  %v1442 = vcvt.s32.f32 %v1435
  %v1443 = vmul.f32 %v1442, %v1440
  %v1444 = vxor.u32 %v1443, 2147483648
  %v1445 = vsel %vm1362, %v1444, %v1443
  %v1446 = vsub.s32 4, %v1422
  %v1447 = vsel %vm1362, %v1446, %v1422
  %v1448 = vsel %vm1361, %v1042, %v1445
  %v1449 = vsel %vm1361, 0, %v1447
  %v1450 = vcosq.f32.pop %v1448
  %v1451 = vsinq.f32.pop %v1448
  %vm1452 = vweird.f32 %v1042
  %v1453 = vadd.s32 %v1449, 3
  %v1454 = vand.u32 %v1453, 3
  %vm1455 = vcmp.lt.s32.totalorder %v1454, 2
  %vm1456 = vcmp.eq.s32.totalorder %v1454, 0
  %v1457 = vxor.u32 %v1451, 2147483648
  %v1458 = vsel %vm1456, %v1450, %v1457
  %vm1459 = vcmp.eq.s32.totalorder %v1454, 2
  %v1460 = vxor.u32 %v1450, 2147483648
  %v1461 = vsel %vm1459, %v1460, %v1451
  %v1462 = vsel %vm1455, %v1458, %v1461
  %v1463 = vsel %vm1452, nan, %v1462
  %v1464 = vand.u32 2147483647, %v1043
  %vm1465 = vcmp.le.f32.partialorder %v1464, 0.7853982
  %vm1466 = vcmp.lt.s32.totalorder %v1043, 0
  %v1467 = vand.u32 %v1043, 2139095040
  %v1468 = vshrl.u32 %v1467, 23
  %v1469 = vsub.s32 %v1468, 127
  %v1470 = vand.u32 2147483647, %v1043
  %v1471 = vand.u32 %v1470, 8388607
  %v1472 = vor.u32 %v1471, 8388608
  %v1473 = vsub.s32 0, %v1472
  %v1474 = vadd.s32 %v1469, 1
  %vm1475 = vcmp.gt.s32.totalorder %v1474, 0
  %v1476 = vsel %vm1475, %v1474, 0
  %v1477 = vshrl.u32 %v1476, 5
  %v1478 = vand.u32 %v1476, 31
  %v1479 = vsub.s32 32, %v1478
  %v1480 = vshrl.u32 683565275, %v1479
  %v1481 = vshll.u32 683565275, %v1478
  %v1482 = vshrl.u32 2475754826, %v1479
  %v1483 = vor.u32 %v1481, %v1482
  %v1484 = vshll.u32 2475754826, %v1478
  %v1485 = vshrl.u32 2131351028, %v1479
  %v1486 = vor.u32 %v1484, %v1485
  %v1487 = vshll.u32 2131351028, %v1478
  %v1488 = vshrl.u32 2102212464, %v1479
  %v1489 = vor.u32 %v1487, %v1488
  %v1490 = vshll.u32 2102212464, %v1478
  %v1491 = vshrl.u32 920167782, %v1479
  %v1492 = vor.u32 %v1490, %v1491
  %v1493 = vshll.u32 920167782, %v1478
  %v1494 = vshrl.u32 1326507024, %v1479
  %v1495 = vor.u32 %v1493, %v1494
  %vm1496 = vcmp.lt.s32.totalorder %v1477, 1
  %vm1497 = vcmp.lt.s32.totalorder %v1477, 2
  %vm1498 = vcmp.lt.s32.totalorder %v1477, 3
  %vm1499 = vcmp.lt.s32.totalorder %v1477, 4
  %v1500 = vsel %vm1496, %v1480, %v1483
  %v1501 = vsel %vm1499, %v1489, 2102212464
  %v1502 = vsel %vm1498, %v1486, %v1501
  %v1503 = vsel %vm1497, %v1500, %v1502
  %v1504 = vsel %vm1496, %v1483, %v1486
  %v1505 = vsel %vm1499, %v1492, 920167782
  %v1506 = vsel %vm1498, %v1489, %v1505
  %v1507 = vsel %vm1497, %v1504, %v1506
  %v1508 = vsel %vm1496, %v1486, %v1489
  %v1509 = vsel %vm1499, %v1495, 1326507024
  %v1510 = vsel %vm1498, %v1492, %v1509
  %v1511 = vsel %vm1497, %v1508, %v1510
  %v1512 = vshll.u32 %v1472, 8
  %v1513 = vmul.u32.u64.compose %v1512, %v1511
  %v1514 = vextract.low.u32 %v1513
  %v1515 = vextract.high.u32 %v1513
  %v1516 = vmul.u32.u64.compose %v1512, %v1507
  %v1517 = vextract.low.u32 %v1516
  %v1518 = vextract.high.u32 %v1516
  %v1519 = vmul.u32 %v1512, %v1503
  %v1520 = vadd.s32 %v1515, %v1517
  %vm1521 = vc.u32 %v1515, %v1517
  %v1522 = vadd.s32 %v1518, 1
  %v1523 = vsel %vm1521, %v1522, %v1518
  %v1524 = vadd.s32 %v1519, %v1523
  %v1525 = vadd.s32 %v1524, 536870912
  %v1526 = vshrl.u32 %v1525, 30
  %v1527 = vshll.u32 %v1526, 30
  %v1528 = vsub.s32 %v1524, %v1527
  %vm1529 = vcmp.lt.s32.totalorder %v1528, 0
  %v1530 = vsub.s32 0, %v1528
  %v1531 = vsel %vm1529, %v1530, %v1528
  %v1532 = vclz %v1531
  %v1533 = vsub.s32 %v1532, 2
  %vm1534 = vcmp.gt.s32.totalorder 0, %v1533
  %v1535 = vsel %vm1534, 0, %v1533
  %v1536 = vsub.s32 32, %v1535
  %v1537 = vshll.u32 %v1528, %v1535
  %v1538 = vshrl.u32 %v1520, %v1536
  %v1539 = vor.u32 %v1537, %v1538
  %v1540 = vsub.s32 4294967266, %v1535
  %v1541 = vadd.s32 %v1540, 127
  %v1542 = vshll.u32 %v1541, 23
  %v1543 = vor.u32 4788187, %v1542
  %v1544 = vand.u32 2147483647, %v1543
  %v1546 = vcvt.s32.f32 %v1539
  %v1547 = vmul.f32 %v1546, %v1544
  %v1548 = vxor.u32 %v1547, 2147483648
  %v1549 = vsel %vm1466, %v1548, %v1547
  %v1550 = vsub.s32 4, %v1526
  %v1551 = vsel %vm1466, %v1550, %v1526
  %v1552 = vsel %vm1465, %v1043, %v1549
  %v1553 = vsel %vm1465, 0, %v1551
  %v1554 = vcosq.f32.pop %v1552
  %v1555 = vsinq.f32.pop %v1552
  %vm1556 = vweird.f32 %v1043
  %v1557 = vadd.s32 %v1553, 3
  %v1558 = vand.u32 %v1557, 3
  %vm1559 = vcmp.lt.s32.totalorder %v1558, 2
  %vm1560 = vcmp.eq.s32.totalorder %v1558, 0
  %v1561 = vxor.u32 %v1555, 2147483648
  %v1562 = vsel %vm1560, %v1554, %v1561
  %vm1563 = vcmp.eq.s32.totalorder %v1558, 2
  %v1564 = vxor.u32 %v1554, 2147483648
  %v1565 = vsel %vm1563, %v1564, %v1555
  %v1566 = vsel %vm1559, %v1562, %v1565
  %v1567 = vsel %vm1556, nan, %v1566
  %v1568 = vand.u32 2147483647, %v1044
  %vm1569 = vcmp.le.f32.partialorder %v1568, 0.7853982
  %vm1570 = vcmp.lt.s32.totalorder %v1044, 0
  %v1571 = vand.u32 %v1044, 2139095040
  %v1572 = vshrl.u32 %v1571, 23
  %v1573 = vsub.s32 %v1572, 127
  %v1574 = vand.u32 2147483647, %v1044
  %v1575 = vand.u32 %v1574, 8388607
  %v1576 = vor.u32 %v1575, 8388608
  %v1577 = vsub.s32 0, %v1576
  %v1578 = vadd.s32 %v1573, 1
  %vm1579 = vcmp.gt.s32.totalorder %v1578, 0
  %v1580 = vsel %vm1579, %v1578, 0
  %v1581 = vshrl.u32 %v1580, 5
  %v1582 = vand.u32 %v1580, 31
  %v1583 = vsub.s32 32, %v1582
  %v1584 = vshrl.u32 683565275, %v1583
  %v1585 = vshll.u32 683565275, %v1582
  %v1586 = vshrl.u32 2475754826, %v1583
  %v1587 = vor.u32 %v1585, %v1586
  %v1588 = vshll.u32 2475754826, %v1582
  %v1589 = vshrl.u32 2131351028, %v1583
  %v1590 = vor.u32 %v1588, %v1589
  %v1591 = vshll.u32 2131351028, %v1582
  %v1592 = vshrl.u32 2102212464, %v1583
  %v1593 = vor.u32 %v1591, %v1592
  %v1594 = vshll.u32 2102212464, %v1582
  %v1595 = vshrl.u32 920167782, %v1583
  %v1596 = vor.u32 %v1594, %v1595
  %v1597 = vshll.u32 920167782, %v1582
  %v1598 = vshrl.u32 1326507024, %v1583
  %v1599 = vor.u32 %v1597, %v1598
  %vm1600 = vcmp.lt.s32.totalorder %v1581, 1
  %vm1601 = vcmp.lt.s32.totalorder %v1581, 2
  %vm1602 = vcmp.lt.s32.totalorder %v1581, 3
  %vm1603 = vcmp.lt.s32.totalorder %v1581, 4
  %v1604 = vsel %vm1600, %v1584, %v1587
  %v1605 = vsel %vm1603, %v1593, 2102212464
  %v1606 = vsel %vm1602, %v1590, %v1605
  %v1607 = vsel %vm1601, %v1604, %v1606
  %v1608 = vsel %vm1600, %v1587, %v1590
  %v1609 = vsel %vm1603, %v1596, 920167782
  %v1610 = vsel %vm1602, %v1593, %v1609
  %v1611 = vsel %vm1601, %v1608, %v1610
  %v1612 = vsel %vm1600, %v1590, %v1593
  %v1613 = vsel %vm1603, %v1599, 1326507024
  %v1614 = vsel %vm1602, %v1596, %v1613
  %v1615 = vsel %vm1601, %v1612, %v1614
  %v1616 = vshll.u32 %v1576, 8
  %v1617 = vmul.u32.u64.compose %v1616, %v1615
  %v1618 = vextract.low.u32 %v1617
  %v1619 = vextract.high.u32 %v1617
  %v1620 = vmul.u32.u64.compose %v1616, %v1611
  %v1621 = vextract.low.u32 %v1620
  %v1622 = vextract.high.u32 %v1620
  %v1623 = vmul.u32 %v1616, %v1607
  %v1624 = vadd.s32 %v1619, %v1621
  %vm1625 = vc.u32 %v1619, %v1621
  %v1626 = vadd.s32 %v1622, 1
  %v1627 = vsel %vm1625, %v1626, %v1622
  %v1628 = vadd.s32 %v1623, %v1627
  %v1629 = vadd.s32 %v1628, 536870912
  %v1630 = vshrl.u32 %v1629, 30
  %v1631 = vshll.u32 %v1630, 30
  %v1632 = vsub.s32 %v1628, %v1631
  %vm1633 = vcmp.lt.s32.totalorder %v1632, 0
  %v1634 = vsub.s32 0, %v1632
  %v1635 = vsel %vm1633, %v1634, %v1632
  %v1636 = vclz %v1635
  %v1637 = vsub.s32 %v1636, 2
  %vm1638 = vcmp.gt.s32.totalorder 0, %v1637
  %v1639 = vsel %vm1638, 0, %v1637
  %v1640 = vsub.s32 32, %v1639
  %v1641 = vshll.u32 %v1632, %v1639
  %v1642 = vshrl.u32 %v1624, %v1640
  %v1643 = vor.u32 %v1641, %v1642
  %v1644 = vsub.s32 4294967266, %v1639
  %v1645 = vadd.s32 %v1644, 127
  %v1646 = vshll.u32 %v1645, 23
  %v1647 = vor.u32 4788187, %v1646
  %v1648 = vand.u32 2147483647, %v1647
  %v1650 = vcvt.s32.f32 %v1643
  %v1651 = vmul.f32 %v1650, %v1648
  %v1652 = vxor.u32 %v1651, 2147483648
  %v1653 = vsel %vm1570, %v1652, %v1651
  %v1654 = vsub.s32 4, %v1630
  %v1655 = vsel %vm1570, %v1654, %v1630
  %v1656 = vsel %vm1569, %v1044, %v1653
  %v1657 = vsel %vm1569, 0, %v1655
  %v1658 = vcosq.f32.pop %v1656
  %v1659 = vsinq.f32.pop %v1656
  %vm1660 = vweird.f32 %v1044
  %v1661 = vadd.s32 %v1657, 3
  %v1662 = vand.u32 %v1661, 3
  %vm1663 = vcmp.lt.s32.totalorder %v1662, 2
  %vm1664 = vcmp.eq.s32.totalorder %v1662, 0
  %v1665 = vxor.u32 %v1659, 2147483648
  %v1666 = vsel %vm1664, %v1658, %v1665
  %vm1667 = vcmp.eq.s32.totalorder %v1662, 2
  %v1668 = vxor.u32 %v1658, 2147483648
  %v1669 = vsel %vm1667, %v1668, %v1659
  %v1670 = vsel %vm1663, %v1666, %v1669
  %v1671 = vsel %vm1660, nan, %v1670
  %v1672 = vand.u32 2147483647, %v1045
  %vm1673 = vcmp.le.f32.partialorder %v1672, 0.7853982
  %vm1674 = vcmp.lt.s32.totalorder %v1045, 0
  %v1675 = vand.u32 %v1045, 2139095040
  %v1676 = vshrl.u32 %v1675, 23
  %v1677 = vsub.s32 %v1676, 127
  %v1678 = vand.u32 2147483647, %v1045
  %v1679 = vand.u32 %v1678, 8388607
  %v1680 = vor.u32 %v1679, 8388608
  %v1681 = vsub.s32 0, %v1680
  %v1682 = vadd.s32 %v1677, 1
  %vm1683 = vcmp.gt.s32.totalorder %v1682, 0
  %v1684 = vsel %vm1683, %v1682, 0
  %v1685 = vshrl.u32 %v1684, 5
  %v1686 = vand.u32 %v1684, 31
  %v1687 = vsub.s32 32, %v1686
  %v1688 = vshrl.u32 683565275, %v1687
  %v1689 = vshll.u32 683565275, %v1686
  %v1690 = vshrl.u32 2475754826, %v1687
  %v1691 = vor.u32 %v1689, %v1690
  %v1692 = vshll.u32 2475754826, %v1686
  %v1693 = vshrl.u32 2131351028, %v1687
  %v1694 = vor.u32 %v1692, %v1693
  %v1695 = vshll.u32 2131351028, %v1686
  %v1696 = vshrl.u32 2102212464, %v1687
  %v1697 = vor.u32 %v1695, %v1696
  %v1698 = vshll.u32 2102212464, %v1686
  %v1699 = vshrl.u32 920167782, %v1687
  %v1700 = vor.u32 %v1698, %v1699
  %v1701 = vshll.u32 920167782, %v1686
  %v1702 = vshrl.u32 1326507024, %v1687
  %v1703 = vor.u32 %v1701, %v1702
  %vm1704 = vcmp.lt.s32.totalorder %v1685, 1
  %vm1705 = vcmp.lt.s32.totalorder %v1685, 2
  %vm1706 = vcmp.lt.s32.totalorder %v1685, 3
  %vm1707 = vcmp.lt.s32.totalorder %v1685, 4
  %v1708 = vsel %vm1704, %v1688, %v1691
  %v1709 = vsel %vm1707, %v1697, 2102212464
  %v1710 = vsel %vm1706, %v1694, %v1709
  %v1711 = vsel %vm1705, %v1708, %v1710
  %v1712 = vsel %vm1704, %v1691, %v1694
  %v1713 = vsel %vm1707, %v1700, 920167782
  %v1714 = vsel %vm1706, %v1697, %v1713
  %v1715 = vsel %vm1705, %v1712, %v1714
  %v1716 = vsel %vm1704, %v1694, %v1697
  %v1717 = vsel %vm1707, %v1703, 1326507024
  %v1718 = vsel %vm1706, %v1700, %v1717
  %v1719 = vsel %vm1705, %v1716, %v1718
  %v1720 = vshll.u32 %v1680, 8
  %v1721 = vmul.u32.u64.compose %v1720, %v1719
  %v1722 = vextract.low.u32 %v1721
  %v1723 = vextract.high.u32 %v1721
  %v1724 = vmul.u32.u64.compose %v1720, %v1715
  %v1725 = vextract.low.u32 %v1724
  %v1726 = vextract.high.u32 %v1724
  %v1727 = vmul.u32 %v1720, %v1711
  %v1728 = vadd.s32 %v1723, %v1725
  %vm1729 = vc.u32 %v1723, %v1725
  %v1730 = vadd.s32 %v1726, 1
  %v1731 = vsel %vm1729, %v1730, %v1726
  %v1732 = vadd.s32 %v1727, %v1731
  %v1733 = vadd.s32 %v1732, 536870912
  %v1734 = vshrl.u32 %v1733, 30
  %v1735 = vshll.u32 %v1734, 30
  %v1736 = vsub.s32 %v1732, %v1735
  %vm1737 = vcmp.lt.s32.totalorder %v1736, 0
  %v1738 = vsub.s32 0, %v1736
  %v1739 = vsel %vm1737, %v1738, %v1736
  %v1740 = vclz %v1739
  %v1741 = vsub.s32 %v1740, 2
  %vm1742 = vcmp.gt.s32.totalorder 0, %v1741
  %v1743 = vsel %vm1742, 0, %v1741
  %v1744 = vsub.s32 32, %v1743
  %v1745 = vshll.u32 %v1736, %v1743
  %v1746 = vshrl.u32 %v1728, %v1744
  %v1747 = vor.u32 %v1745, %v1746
  %v1748 = vsub.s32 4294967266, %v1743
  %v1749 = vadd.s32 %v1748, 127
  %v1750 = vshll.u32 %v1749, 23
  %v1751 = vor.u32 4788187, %v1750
  %v1752 = vand.u32 2147483647, %v1751
  %v1754 = vcvt.s32.f32 %v1747
  %v1755 = vmul.f32 %v1754, %v1752
  %v1756 = vxor.u32 %v1755, 2147483648
  %v1757 = vsel %vm1674, %v1756, %v1755
  %v1758 = vsub.s32 4, %v1734
  %v1759 = vsel %vm1674, %v1758, %v1734
  %v1760 = vsel %vm1673, %v1045, %v1757
  %v1761 = vsel %vm1673, 0, %v1759
  %v1762 = vcosq.f32.pop %v1760
  %v1763 = vsinq.f32.pop %v1760
  %vm1764 = vweird.f32 %v1045
  %v1765 = vadd.s32 %v1761, 3
  %v1766 = vand.u32 %v1765, 3
  %vm1767 = vcmp.lt.s32.totalorder %v1766, 2
  %vm1768 = vcmp.eq.s32.totalorder %v1766, 0
  %v1769 = vxor.u32 %v1763, 2147483648
  %v1770 = vsel %vm1768, %v1762, %v1769
  %vm1771 = vcmp.eq.s32.totalorder %v1766, 2
  %v1772 = vxor.u32 %v1762, 2147483648
  %v1773 = vsel %vm1771, %v1772, %v1763
  %v1774 = vsel %vm1767, %v1770, %v1773
  %v1775 = vsel %vm1764, nan, %v1774
  %v1776 = vand.u32 2147483647, %v1046
  %vm1777 = vcmp.le.f32.partialorder %v1776, 0.7853982
  %vm1778 = vcmp.lt.s32.totalorder %v1046, 0
  %v1779 = vand.u32 %v1046, 2139095040
  %v1780 = vshrl.u32 %v1779, 23
  %v1781 = vsub.s32 %v1780, 127
  %v1782 = vand.u32 2147483647, %v1046
  %v1783 = vand.u32 %v1782, 8388607
  %v1784 = vor.u32 %v1783, 8388608
  %v1785 = vsub.s32 0, %v1784
  %v1786 = vadd.s32 %v1781, 1
  %vm1787 = vcmp.gt.s32.totalorder %v1786, 0
  %v1788 = vsel %vm1787, %v1786, 0
  %v1789 = vshrl.u32 %v1788, 5
  %v1790 = vand.u32 %v1788, 31
  %v1791 = vsub.s32 32, %v1790
  %v1792 = vshrl.u32 683565275, %v1791
  %v1793 = vshll.u32 683565275, %v1790
  %v1794 = vshrl.u32 2475754826, %v1791
  %v1795 = vor.u32 %v1793, %v1794
  %v1796 = vshll.u32 2475754826, %v1790
  %v1797 = vshrl.u32 2131351028, %v1791
  %v1798 = vor.u32 %v1796, %v1797
  %v1799 = vshll.u32 2131351028, %v1790
  %v1800 = vshrl.u32 2102212464, %v1791
  %v1801 = vor.u32 %v1799, %v1800
  %v1802 = vshll.u32 2102212464, %v1790
  %v1803 = vshrl.u32 920167782, %v1791
  %v1804 = vor.u32 %v1802, %v1803
  %v1805 = vshll.u32 920167782, %v1790
  %v1806 = vshrl.u32 1326507024, %v1791
  %v1807 = vor.u32 %v1805, %v1806
  %vm1808 = vcmp.lt.s32.totalorder %v1789, 1
  %vm1809 = vcmp.lt.s32.totalorder %v1789, 2
  %vm1810 = vcmp.lt.s32.totalorder %v1789, 3
  %vm1811 = vcmp.lt.s32.totalorder %v1789, 4
  %v1812 = vsel %vm1808, %v1792, %v1795
  %v1813 = vsel %vm1811, %v1801, 2102212464
  %v1814 = vsel %vm1810, %v1798, %v1813
  %v1815 = vsel %vm1809, %v1812, %v1814
  %v1816 = vsel %vm1808, %v1795, %v1798
  %v1817 = vsel %vm1811, %v1804, 920167782
  %v1818 = vsel %vm1810, %v1801, %v1817
  %v1819 = vsel %vm1809, %v1816, %v1818
  %v1820 = vsel %vm1808, %v1798, %v1801
  %v1821 = vsel %vm1811, %v1807, 1326507024
  %v1822 = vsel %vm1810, %v1804, %v1821
  %v1823 = vsel %vm1809, %v1820, %v1822
  %v1824 = vshll.u32 %v1784, 8
  %v1825 = vmul.u32.u64.compose %v1824, %v1823
  %v1826 = vextract.low.u32 %v1825
  %v1827 = vextract.high.u32 %v1825
  %v1828 = vmul.u32.u64.compose %v1824, %v1819
  %v1829 = vextract.low.u32 %v1828
  %v1830 = vextract.high.u32 %v1828
  %v1831 = vmul.u32 %v1824, %v1815
  %v1832 = vadd.s32 %v1827, %v1829
  %vm1833 = vc.u32 %v1827, %v1829
  %v1834 = vadd.s32 %v1830, 1
  %v1835 = vsel %vm1833, %v1834, %v1830
  %v1836 = vadd.s32 %v1831, %v1835
  %v1837 = vadd.s32 %v1836, 536870912
  %v1838 = vshrl.u32 %v1837, 30
  %v1839 = vshll.u32 %v1838, 30
  %v1840 = vsub.s32 %v1836, %v1839
  %vm1841 = vcmp.lt.s32.totalorder %v1840, 0
  %v1842 = vsub.s32 0, %v1840
  %v1843 = vsel %vm1841, %v1842, %v1840
  %v1844 = vclz %v1843
  %v1845 = vsub.s32 %v1844, 2
  %vm1846 = vcmp.gt.s32.totalorder 0, %v1845
  %v1847 = vsel %vm1846, 0, %v1845
  %v1848 = vsub.s32 32, %v1847
  %v1849 = vshll.u32 %v1840, %v1847
  %v1850 = vshrl.u32 %v1832, %v1848
  %v1851 = vor.u32 %v1849, %v1850
  %v1852 = vsub.s32 4294967266, %v1847
  %v1853 = vadd.s32 %v1852, 127
  %v1854 = vshll.u32 %v1853, 23
  %v1855 = vor.u32 4788187, %v1854
  %v1856 = vand.u32 2147483647, %v1855
  %v1858 = vcvt.s32.f32 %v1851
  %v1859 = vmul.f32 %v1858, %v1856
  %v1860 = vxor.u32 %v1859, 2147483648
  %v1861 = vsel %vm1778, %v1860, %v1859
  %v1862 = vsub.s32 4, %v1838
  %v1863 = vsel %vm1778, %v1862, %v1838
  %v1864 = vsel %vm1777, %v1046, %v1861
  %v1865 = vsel %vm1777, 0, %v1863
  %v1866 = vcosq.f32.pop %v1864
  %v1867 = vsinq.f32.pop %v1864
  %vm1868 = vweird.f32 %v1046
  %v1869 = vadd.s32 %v1865, 3
  %v1870 = vand.u32 %v1869, 3
  %vm1871 = vcmp.lt.s32.totalorder %v1870, 2
  %vm1872 = vcmp.eq.s32.totalorder %v1870, 0
  %v1873 = vxor.u32 %v1867, 2147483648
  %v1874 = vsel %vm1872, %v1866, %v1873
  %vm1875 = vcmp.eq.s32.totalorder %v1870, 2
  %v1876 = vxor.u32 %v1866, 2147483648
  %v1877 = vsel %vm1875, %v1876, %v1867
  %v1878 = vsel %vm1871, %v1874, %v1877
  %v1879 = vsel %vm1868, nan, %v1878
  %v1880 = vand.u32 2147483647, %v1047
  %vm1881 = vcmp.le.f32.partialorder %v1880, 0.7853982
  %vm1882 = vcmp.lt.s32.totalorder %v1047, 0
  %v1883 = vand.u32 %v1047, 2139095040
  %v1884 = vshrl.u32 %v1883, 23
  %v1885 = vsub.s32 %v1884, 127
  %v1886 = vand.u32 2147483647, %v1047
  %v1887 = vand.u32 %v1886, 8388607
  %v1888 = vor.u32 %v1887, 8388608
  %v1889 = vsub.s32 0, %v1888
  %v1890 = vadd.s32 %v1885, 1
  %vm1891 = vcmp.gt.s32.totalorder %v1890, 0
  %v1892 = vsel %vm1891, %v1890, 0
  %v1893 = vshrl.u32 %v1892, 5
  %v1894 = vand.u32 %v1892, 31
  %v1895 = vsub.s32 32, %v1894
  %v1896 = vshrl.u32 683565275, %v1895
  %v1897 = vshll.u32 683565275, %v1894
  %v1898 = vshrl.u32 2475754826, %v1895
  %v1899 = vor.u32 %v1897, %v1898
  %v1900 = vshll.u32 2475754826, %v1894
  %v1901 = vshrl.u32 2131351028, %v1895
  %v1902 = vor.u32 %v1900, %v1901
  %v1903 = vshll.u32 2131351028, %v1894
  %v1904 = vshrl.u32 2102212464, %v1895
  %v1905 = vor.u32 %v1903, %v1904
  %v1906 = vshll.u32 2102212464, %v1894
  %v1907 = vshrl.u32 920167782, %v1895
  %v1908 = vor.u32 %v1906, %v1907
  %v1909 = vshll.u32 920167782, %v1894
  %v1910 = vshrl.u32 1326507024, %v1895
  %v1911 = vor.u32 %v1909, %v1910
  %vm1912 = vcmp.lt.s32.totalorder %v1893, 1
  %vm1913 = vcmp.lt.s32.totalorder %v1893, 2
  %vm1914 = vcmp.lt.s32.totalorder %v1893, 3
  %vm1915 = vcmp.lt.s32.totalorder %v1893, 4
  %v1916 = vsel %vm1912, %v1896, %v1899
  %v1917 = vsel %vm1915, %v1905, 2102212464
  %v1918 = vsel %vm1914, %v1902, %v1917
  %v1919 = vsel %vm1913, %v1916, %v1918
  %v1920 = vsel %vm1912, %v1899, %v1902
  %v1921 = vsel %vm1915, %v1908, 920167782
  %v1922 = vsel %vm1914, %v1905, %v1921
  %v1923 = vsel %vm1913, %v1920, %v1922
  %v1924 = vsel %vm1912, %v1902, %v1905
  %v1925 = vsel %vm1915, %v1911, 1326507024
  %v1926 = vsel %vm1914, %v1908, %v1925
  %v1927 = vsel %vm1913, %v1924, %v1926
  %v1928 = vshll.u32 %v1888, 8
  %v1929 = vmul.u32.u64.compose %v1928, %v1927
  %v1930 = vextract.low.u32 %v1929
  %v1931 = vextract.high.u32 %v1929
  %v1932 = vmul.u32.u64.compose %v1928, %v1923
  %v1933 = vextract.low.u32 %v1932
  %v1934 = vextract.high.u32 %v1932
  %v1935 = vmul.u32 %v1928, %v1919
  %v1936 = vadd.s32 %v1931, %v1933
  %vm1937 = vc.u32 %v1931, %v1933
  %v1938 = vadd.s32 %v1934, 1
  %v1939 = vsel %vm1937, %v1938, %v1934
  %v1940 = vadd.s32 %v1935, %v1939
  %v1941 = vadd.s32 %v1940, 536870912
  %v1942 = vshrl.u32 %v1941, 30
  %v1943 = vshll.u32 %v1942, 30
  %v1944 = vsub.s32 %v1940, %v1943
  %vm1945 = vcmp.lt.s32.totalorder %v1944, 0
  %v1946 = vsub.s32 0, %v1944
  %v1947 = vsel %vm1945, %v1946, %v1944
  %v1948 = vclz %v1947
  %v1949 = vsub.s32 %v1948, 2
  %vm1950 = vcmp.gt.s32.totalorder 0, %v1949
  %v1951 = vsel %vm1950, 0, %v1949
  %v1952 = vsub.s32 32, %v1951
  %v1953 = vshll.u32 %v1944, %v1951
  %v1954 = vshrl.u32 %v1936, %v1952
  %v1955 = vor.u32 %v1953, %v1954
  %v1956 = vsub.s32 4294967266, %v1951
  %v1957 = vadd.s32 %v1956, 127
  %v1958 = vshll.u32 %v1957, 23
  %v1959 = vor.u32 4788187, %v1958
  %v1960 = vand.u32 2147483647, %v1959
  %v1962 = vcvt.s32.f32 %v1955
  %v1963 = vmul.f32 %v1962, %v1960
  %v1964 = vxor.u32 %v1963, 2147483648
  %v1965 = vsel %vm1882, %v1964, %v1963
  %v1966 = vsub.s32 4, %v1942
  %v1967 = vsel %vm1882, %v1966, %v1942
  %v1968 = vsel %vm1881, %v1047, %v1965
  %v1969 = vsel %vm1881, 0, %v1967
  %v1970 = vcosq.f32.pop %v1968
  %v1971 = vsinq.f32.pop %v1968
  %vm1972 = vweird.f32 %v1047
  %v1973 = vadd.s32 %v1969, 3
  %v1974 = vand.u32 %v1973, 3
  %vm1975 = vcmp.lt.s32.totalorder %v1974, 2
  %vm1976 = vcmp.eq.s32.totalorder %v1974, 0
  %v1977 = vxor.u32 %v1971, 2147483648
  %v1978 = vsel %vm1976, %v1970, %v1977
  %vm1979 = vcmp.eq.s32.totalorder %v1974, 2
  %v1980 = vxor.u32 %v1970, 2147483648
  %v1981 = vsel %vm1979, %v1980, %v1971
  %v1982 = vsel %vm1975, %v1978, %v1981
  %v1983 = vsel %vm1972, nan, %v1982
  %v1992 = vcombine.low %v1151, %v1255
  %v1993 = vcombine.low %v1359, %v1463
  %v1994 = vcombine.low %v1567, %v1671
  %v1995 = vcombine.low %v1775, %v1879
  %2000 = vst [vmem:[%s3] sm:$0xff] %v1992
  %2001 = vst [vmem:[%s3 + $0x8] sm:$0xff] %v1993
  %2002 = vst [vmem:[%s3 + $0x10] sm:$0xff] %v1994
  %2003 = vst [vmem:[%s3 + $0x18] sm:$0xff] %v1995
  %2004 = vst [vmem:[%s3 + $0x20] sm:$0xf] %v1983
  // Predicated region
  $region14: #{harmonic_embedding.1} parent=0 // pred_check
    _
  $region15: #{harmonic_embedding.1} parent=0 // pred_check_branch
    %2006 = sbr.rel (0) target = $region17
  $region16: #{harmonic_embedding.1} parent=0 // pred_region
    _
  $region17: #{harmonic_embedding.1} parent=0 // pred_fallthru
    _
  // Predicated region
  $region18: #{harmonic_embedding.1} parent=0 // pred_check
    _
  $region19: #{harmonic_embedding.1} parent=0 // pred_check_branch
    %2008 = sbr.rel (0) target = $region21
  $region20: #{harmonic_embedding.1} parent=0 // pred_region
    _
  $region21: #{harmonic_embedding.1} parent=0 // pred_fallthru
    _

</llo_original>
